<compile_context>
chip_gen: v6e
topology: v6e:2x2x1
jax: 0.10.0
libtpu: 0.0.40
codegen_flags: <defaults>
</compile_context>

<pallas_src>
import functools
import math

import jax
import jax.numpy as jnp
import numpy as np
from jax import lax
from jax.experimental import pallas as pl
from jax.experimental.pallas import tpu as pltpu

EPS = 1e-5            # nn.LayerNorm default eps
NEG_INF = -1e30       # causal-mask fill (softmax-equivalent to -inf)


def _layernorm(x, gamma, beta):
    mu = jnp.mean(x, axis=-1, keepdims=True)
    var = jnp.mean((x - mu) ** 2, axis=-1, keepdims=True)
    return (x - mu) * lax.rsqrt(var + EPS) * gamma + beta


# --------------------------------------------------------------------------
# Kernel 1 (fused): positional add + all ResidualAttentionBlocks
#   grid = (batch_blocks, LAYERS); residual stream resident in o_ref across layers
# --------------------------------------------------------------------------
def fused_block_kernel(x_ref, pos_ref,
                       ln1g_ref, ln1b_ref, wqkv_ref, bqkv_ref, wout_ref, bout_ref,
                       ln2g_ref, ln2b_ref, wfc_ref, bfc_ref, wproj_ref, bproj_ref,
                       o_ref, *, num_heads):
    layer = pl.program_id(1)

    # Layer 0: initialize resident activations; fold in positional embedding.
    @pl.when(layer == 0)
    def _():
        o_ref[...] = x_ref[...] + pos_ref[...]

    xb = o_ref[...]                               # (BB, L, D) f32, resident in VMEM
    BB, L, D = xb.shape
    H = num_heads
    hd = D // H
    M = BB * L
    x2 = xb.reshape(M, D)

    # ---------------- attention branch: x + out_proj(MHA(ln_1(x))) ----------------
    h = _layernorm(x2, ln1g_ref[0], ln1b_ref[0])                       # f32
    qkv = jnp.dot(h.astype(jnp.bfloat16), wqkv_ref[0],
                  preferred_element_type=jnp.float32) + bqkv_ref[0]    # (M, 3D) f32
    q = qkv[:, :D]                    # 1/sqrt(hd) already folded into W_qkv/b_qkv
    k = qkv[:, D:2 * D]
    v = qkv[:, 2 * D:]

    # causal mask generated in-kernel (no (L, L) operand DMA)
    rows = lax.broadcasted_iota(jnp.int32, (L, L), 0)
    cols = lax.broadcasted_iota(jnp.int32, (L, L), 1)
    mask = jnp.where(cols <= rows, 0.0, NEG_INF).astype(jnp.float32)

    wout_h = wout_ref[0]                                               # (H, hd, D) bf16

    attn_rows = []
    for b in range(BB):                               # static, small batch block
        sl = slice(b * L, (b + 1) * L)
        # heads -> leading batch dim via static slices + stack: (H, L, hd)
        qh = jnp.stack([q[sl, i * hd:(i + 1) * hd] for i in range(H)],
                       axis=0).astype(jnp.bfloat16)
        kh = jnp.stack([k[sl, i * hd:(i + 1) * hd] for i in range(H)],
                       axis=0).astype(jnp.bfloat16)
        vh = jnp.stack([v[sl, i * hd:(i + 1) * hd] for i in range(H)],
                       axis=0).astype(jnp.bfloat16)
        s = jnp.einsum('hqd,hkd->hqk', qh, kh,
                       preferred_element_type=jnp.float32)             # (H, L, L)
        s = s + mask[None]
        s = s - jnp.max(s, axis=-1, keepdims=True)
        p = jnp.exp(s)                                                 # f32 softmax
        p = p * pl.reciprocal(jnp.sum(p, axis=-1, keepdims=True), approx=True)
        oh = jnp.einsum('hqk,hkd->hqd', p.astype(jnp.bfloat16), vh,
                        preferred_element_type=jnp.float32)            # (H, L, hd)
        # out-projection folded per head: concat_h(o_h) @ W_out == sum_h o_h @ W_out[h]
        ob = jnp.einsum('hqd,hde->hqe', oh.astype(jnp.bfloat16), wout_h,
                        preferred_element_type=jnp.float32)            # (H, L, D)
        attn_rows.append(jnp.sum(ob, axis=0))                          # (L, D)
    attn = attn_rows[0] if BB == 1 else jnp.concatenate(attn_rows, axis=0)
    x2 = x2 + attn + bout_ref[0]

    # ---------------- MLP branch: x + c_proj(QuickGELU(c_fc(ln_2(x)))) ----------------
    h2 = _layernorm(x2, ln2g_ref[0], ln2b_ref[0])
    u = jnp.dot(h2.astype(jnp.bfloat16), wfc_ref[0],
                preferred_element_type=jnp.float32) + bfc_ref[0]
    u = u * jax.nn.sigmoid(1.702 * u)                 # QuickGELU (CLIP), f32
    m = jnp.dot(u.astype(jnp.bfloat16), wproj_ref[0],
                preferred_element_type=jnp.float32) + bproj_ref[0]
    x2 = x2 + m

    o_ref[...] = x2.reshape(BB, L, D).astype(o_ref.dtype)


def transformer_forward(prompts, prep, num_heads):
    N, L, D = prompts.shape
    n_layers = prep['w_qkv'].shape[0]
    assert D % num_heads == 0
    hd = D // num_heads

    bb = 1                                           # sequences per grid step
    for cand in (8, 4, 2):
        if N % cand == 0:
            bb = cand
            break

    xmap = lambda b, l: (b, 0, 0)
    cmap2 = lambda b, l: (0, 0)
    lmap3 = lambda b, l: (l, 0, 0)
    lmap4 = lambda b, l: (l, 0, 0, 0)

    return pl.pallas_call(
        functools.partial(fused_block_kernel, num_heads=num_heads),
        out_shape=jax.ShapeDtypeStruct((N, L, D), jnp.float32),
        grid=(N // bb, n_layers),
        in_specs=[
            pl.BlockSpec((bb, L, D), xmap),                  # prompts
            pl.BlockSpec((L, D), cmap2),                     # positional embedding
            pl.BlockSpec((1, 1, D), lmap3),                  # ln1 gamma
            pl.BlockSpec((1, 1, D), lmap3),                  # ln1 beta
            pl.BlockSpec((1, D, 3 * D), lmap3),              # W_qkv (bf16, scale folded)
            pl.BlockSpec((1, 1, 3 * D), lmap3),              # b_qkv (scale folded)
            pl.BlockSpec((1, num_heads, hd, D), lmap4),      # W_out per-head (bf16)
            pl.BlockSpec((1, 1, D), lmap3),                  # b_out
            pl.BlockSpec((1, 1, D), lmap3),                  # ln2 gamma
            pl.BlockSpec((1, 1, D), lmap3),                  # ln2 beta
            pl.BlockSpec((1, D, 4 * D), lmap3),              # W_fc (bf16)
            pl.BlockSpec((1, 1, 4 * D), lmap3),              # b_fc
            pl.BlockSpec((1, 4 * D, D), lmap3),              # W_proj (bf16)
            pl.BlockSpec((1, 1, D), lmap3),                  # b_proj
        ],
        out_specs=pl.BlockSpec((bb, L, D), xmap),
        compiler_params=pltpu.CompilerParams(
            dimension_semantics=("parallel", "arbitrary"),
            vmem_limit_bytes=48 * 1024 * 1024),
    )(prompts, prep['pos'],
      prep['ln1_g'], prep['ln1_b'], prep['w_qkv'], prep['b_qkv'],
      prep['w_out'], prep['b_out'], prep['ln2_g'], prep['ln2_b'],
      prep['w_fc'], prep['b_fc'], prep['w_proj'], prep['b_proj'])


# --------------------------------------------------------------------------
# Kernel 2: ln_final at the EOT token + text_projection
#   EOT indices via scalar prefetch; x streamed one sequence at a time; rows
#   gathered into VMEM scratch; single (N, D) @ (D, E) GEMM at the last step.
# --------------------------------------------------------------------------
def final_kernel(eot_ref, x_ref, g_ref, b_ref, proj_ref, o_ref, rows_ref):
    b = pl.program_id(0)
    idx = eot_ref[b]                                        # scalar from SMEM
    rows_ref[pl.ds(b, 1), :] = x_ref[0, pl.ds(idx, 1), :]   # gather EOT row

    @pl.when(b == pl.num_programs(0) - 1)
    def _():
        h = _layernorm(rows_ref[...], g_ref[...], b_ref[...])
        o_ref[...] = jnp.dot(h.astype(jnp.bfloat16), proj_ref[...],
                             preferred_element_type=jnp.float32).astype(o_ref.dtype)


def final_projection(x, eot_idx, lnf_g, lnf_b, proj_bf16):
    N, L, D = x.shape
    E = proj_bf16.shape[1]
    return pl.pallas_call(
        final_kernel,
        out_shape=jax.ShapeDtypeStruct((N, E), jnp.float32),
        grid_spec=pltpu.PrefetchScalarGridSpec(
            num_scalar_prefetch=1,
            grid=(N,),
            in_specs=[
                pl.BlockSpec((1, L, D), lambda b, eot: (b, 0, 0)),   # x (one seq per step)
                pl.BlockSpec((1, D), lambda b, eot: (0, 0)),         # ln_final gamma
                pl.BlockSpec((1, D), lambda b, eot: (0, 0)),         # ln_final beta
                pl.BlockSpec((D, E), lambda b, eot: (0, 0)),         # text_projection (bf16)
            ],
            out_specs=pl.BlockSpec((N, E), lambda b, eot: (0, 0)),
            scratch_shapes=[pltpu.VMEM((N, D), jnp.float32)],
        ),
        compiler_params=pltpu.CompilerParams(
            dimension_semantics=("arbitrary",),
            vmem_limit_bytes=48 * 1024 * 1024),
    )(eot_idx, x, lnf_g, lnf_b, proj_bf16)


# --------------------------------------------------------------------------
# Full forward (matches TextEncoder.forward)
# --------------------------------------------------------------------------
def text_encoder_forward(prompts, tokenized_prompts, prep, num_heads):
    x = transformer_forward(prompts, prep, num_heads)
    eot_idx = jnp.argmax(tokenized_prompts, axis=-1).astype(jnp.int32)  # glue
    return final_projection(x, eot_idx, prep['lnf_g'], prep['lnf_b'], prep['proj'])


# --------------------------------------------------------------------------
# Parameter prep: stack layers, fold attention scale, cast big weights to bf16
# --------------------------------------------------------------------------
def prepare_params(params, num_heads):
    layers = params['layers']
    n_layers = len(layers)
    D = layers[0]['w_qkv'].shape[0]
    hd = D // num_heads
    scale = 1.0 / math.sqrt(hd)

    def stack(key):
        return jnp.stack([lyr[key] for lyr in layers], axis=0)

    w_qkv = stack('w_qkv')                      # (LAYERS, D, 3D)
    b_qkv = stack('b_qkv')                      # (LAYERS, 1, 3D)
    w_qkv = w_qkv.at[:, :, :D].multiply(scale)  # fold 1/sqrt(hd) into the q part
    b_qkv = b_qkv.at[:, :, :D].multiply(scale)
    w_out = stack('w_out').reshape(n_layers, num_heads, hd, D)

    return {
        'pos': params['pos'],
        'ln1_g': stack('ln1_g'), 'ln1_b': stack('ln1_b'),
        'w_qkv': w_qkv.astype(jnp.bfloat16), 'b_qkv': b_qkv,
        'w_out': w_out.astype(jnp.bfloat16), 'b_out': stack('b_out'),
        'ln2_g': stack('ln2_g'), 'ln2_b': stack('ln2_b'),
        'w_fc': stack('w_fc').astype(jnp.bfloat16), 'b_fc': stack('b_fc'),
        'w_proj': stack('w_proj').astype(jnp.bfloat16), 'b_proj': stack('b_proj'),
        'lnf_g': params['lnf_g'], 'lnf_b': params['lnf_b'],
        'proj': params['proj'].astype(jnp.bfloat16),
    }


# --------------------------------------------------------------------------
# Pure-JAX f32 reference (for a correctness check)
# --------------------------------------------------------------------------
def reference_forward(prompts, tokenized_prompts, params, num_heads):
    hp = lax.Precision.HIGHEST
    x = prompts + params['pos'][None]
    N, L, D = x.shape
    hd = D // num_heads
    scale = 1.0 / np.sqrt(hd)
    mask = jnp.triu(jnp.full((L, L), NEG_INF, jnp.float32), k=1)
    for layer in params['layers']:
        h = _layernorm(x, layer['ln1_g'], layer['ln1_b'])
        qkv = jnp.einsum('nld,de->nle', h, layer['w_qkv'], precision=hp) + layer['b_qkv']
        q, k, v = jnp.split(qkv, 3, axis=-1)
        q = q.reshape(N, L, num_heads, hd) * scale
        k = k.reshape(N, L, num_heads, hd)
        v = v.reshape(N, L, num_heads, hd)
        s = jnp.einsum('nqhd,nkhd->nhqk', q, k, precision=hp) + mask
        p = jax.nn.softmax(s, axis=-1)
        o = jnp.einsum('nhqk,nkhd->nqhd', p, v, precision=hp).reshape(N, L, D)
        x = x + jnp.einsum('nld,de->nle', o, layer['w_out'], precision=hp) + layer['b_out']
        h2 = _layernorm(x, layer['ln2_g'], layer['ln2_b'])
        u = jnp.einsum('nld,de->nle', h2, layer['w_fc'], precision=hp) + layer['b_fc']
        u = u * jax.nn.sigmoid(1.702 * u)
        x = x + jnp.einsum('nld,de->nle', u, layer['w_proj'], precision=hp) + layer['b_proj']
    eot = jnp.argmax(tokenized_prompts, axis=-1)
    sel = x[jnp.arange(N), eot]
    sel = _layernorm(sel, params['lnf_g'], params['lnf_b'])
    return jnp.dot(sel, params['proj'], precision=hp)


# --------------------------------------------------------------------------
# Deterministic synthetic parameters
# --------------------------------------------------------------------------
def init_params(key, *, layers, D, E, L):
    keys = jax.random.split(key, 2 + layers)
    p = {
        'pos': 0.01 * jax.random.normal(keys[0], (L, D), jnp.float32),
        'lnf_g': jnp.ones((1, D), jnp.float32),
        'lnf_b': jnp.zeros((1, D), jnp.float32),
        'proj': (D ** -0.5) * jax.random.normal(keys[1], (D, E), jnp.float32),
        'layers': [],
    }
    std = 0.02
    for i in range(layers):
        lk = jax.random.split(keys[2 + i], 8)
        p['layers'].append({
            'ln1_g': jnp.ones((1, D), jnp.float32),
            'ln1_b': jnp.zeros((1, D), jnp.float32),
            'w_qkv': std * jax.random.normal(lk[0], (D, 3 * D), jnp.float32),
            'b_qkv': 0.01 * jax.random.normal(lk[1], (1, 3 * D), jnp.float32),
            'w_out': std * jax.random.normal(lk[2], (D, D), jnp.float32),
            'b_out': 0.01 * jax.random.normal(lk[3], (1, D), jnp.float32),
            'ln2_g': jnp.ones((1, D), jnp.float32),
            'ln2_b': jnp.zeros((1, D), jnp.float32),
            'w_fc': std * jax.random.normal(lk[4], (D, 4 * D), jnp.float32),
            'b_fc': 0.01 * jax.random.normal(lk[5], (1, 4 * D), jnp.float32),
            'w_proj': std * jax.random.normal(lk[6], (4 * D, D), jnp.float32),
            'b_proj': 0.01 * jax.random.normal(lk[7], (1, D), jnp.float32),
        })
    return p


if __name__ == "__main__":
    N, L, D, H, E, LAYERS = 2, 8, 32, 4, 64, 2
    key = jax.random.PRNGKey(0)
    kp, kt, kw = jax.random.split(key, 3)

    prompts = jax.random.normal(kp, (N, L, D), jnp.float32)          # prompt embeddings
    tokenized = jax.random.randint(kt, (N, L), 1, 1000, jnp.int32)   # token ids (argmax -> EOT pos)
    params = init_params(kw, layers=LAYERS, D=D, E=E, L=L)
    prep = prepare_params(params, num_heads=H)

    out = text_encoder_forward(prompts, tokenized, prep, H)
    out = jax.block_until_ready(out)

    assert out.shape == (N, E)
    assert bool(jnp.all(jnp.isfinite(out)))
    ref = reference_forward(prompts, tokenized, params, H)
    # bf16 matmul operands (matching CLIP's reduced-precision dtype) vs f32 reference
    np.testing.assert_allclose(np.asarray(out), np.asarray(ref), rtol=5e-2, atol=3e-2)
    print("KERNEL_OK")
</pallas_src>

<mosaic_0001>
module attributes {stable_mosaic.version = 11 : i64} {
  func.func @fused_block_kernel(%arg0: i32, %arg1: i32, %arg2: memref<2x8x32xf32, #tpu.memory_space<vmem>>, %arg3: memref<8x32xf32, #tpu.memory_space<vmem>>, %arg4: memref<1x1x32xf32, #tpu.memory_space<vmem>>, %arg5: memref<1x1x32xf32, #tpu.memory_space<vmem>>, %arg6: memref<1x32x96xbf16, #tpu.memory_space<vmem>>, %arg7: memref<1x1x96xf32, #tpu.memory_space<vmem>>, %arg8: memref<1x4x8x32xbf16, #tpu.memory_space<vmem>>, %arg9: memref<1x1x32xf32, #tpu.memory_space<vmem>>, %arg10: memref<1x1x32xf32, #tpu.memory_space<vmem>>, %arg11: memref<1x1x32xf32, #tpu.memory_space<vmem>>, %arg12: memref<1x32x128xbf16, #tpu.memory_space<vmem>>, %arg13: memref<1x1x128xf32, #tpu.memory_space<vmem>>, %arg14: memref<1x128x32xbf16, #tpu.memory_space<vmem>>, %arg15: memref<1x1x32xf32, #tpu.memory_space<vmem>>, %arg16: memref<2x8x32xf32, #tpu.memory_space<vmem>>) attributes {dimension_semantics = [#tpu.dimension_semantics<parallel>, #tpu.dimension_semantics<arbitrary>], iteration_bounds = array<i64: 1, 2>, scalar_prefetch = 0 : i64, scratch_operands = 0 : i64, tpu.core_type = #tpu.core_type<tc>, window_params = [{transform_indices = @transform_0, window_bounds = array<i64: 2, 8, 32>}, {pipeline_mode = #tpu.pipeline_mode<synchronous>, transform_indices = @transform_1, window_bounds = array<i64: 8, 32>}, {transform_indices = @transform_2, window_bounds = array<i64: 1, 1, 32>}, {transform_indices = @transform_3, window_bounds = array<i64: 1, 1, 32>}, {transform_indices = @transform_4, window_bounds = array<i64: 1, 32, 96>}, {transform_indices = @transform_5, window_bounds = array<i64: 1, 1, 96>}, {transform_indices = @transform_6, window_bounds = array<i64: 1, 4, 8, 32>}, {transform_indices = @transform_7, window_bounds = array<i64: 1, 1, 32>}, {transform_indices = @transform_8, window_bounds = array<i64: 1, 1, 32>}, {transform_indices = @transform_9, window_bounds = array<i64: 1, 1, 32>}, {transform_indices = @transform_10, window_bounds = array<i64: 1, 32, 128>}, {transform_indices = @transform_11, window_bounds = array<i64: 1, 1, 128>}, {transform_indices = @transform_12, window_bounds = array<i64: 1, 128, 32>}, {transform_indices = @transform_13, window_bounds = array<i64: 1, 1, 32>}, {transform_indices = @transform_14, window_bounds = array<i64: 2, 8, 32>}]} {
    %c0_i32 = arith.constant 0 : i32
    %0 = arith.cmpi eq, %arg1, %c0_i32 : i32
    %1 = arith.extui %0 : i1 to i32
    %c0_i32_0 = arith.constant 0 : i32
    %2 = arith.cmpi ne, %1, %c0_i32_0 : i32
    scf.if %2 {
      %c0_71 = arith.constant 0 : index
      %c0_72 = arith.constant 0 : index
      %c0_73 = arith.constant 0 : index
      %207 = vector.load %arg2[%c0_71, %c0_72, %c0_73] : memref<2x8x32xf32, #tpu.memory_space<vmem>>, vector<2x8x32xf32>
      %c0_74 = arith.constant 0 : index
      %c0_75 = arith.constant 0 : index
      %208 = vector.load %arg3[%c0_74, %c0_75] : memref<8x32xf32, #tpu.memory_space<vmem>>, vector<8x32xf32>
      %209 = vector.shape_cast %208 : vector<8x32xf32> to vector<1x8x32xf32>
      %210 = vector.broadcast %209 : vector<1x8x32xf32> to vector<2x8x32xf32>
      %211 = arith.addf %207, %210 : vector<2x8x32xf32>
      %c0_76 = arith.constant 0 : index
      %c0_77 = arith.constant 0 : index
      %c0_78 = arith.constant 0 : index
      %212 = vector.load %arg16[%c0_76, %c0_77, %c0_78] : memref<2x8x32xf32, #tpu.memory_space<vmem>>, vector<2x8x32xf32>
      tpu.vector_store %arg16[%c0_76, %c0_77, %c0_78], %211 {strides = array<i32>} : memref<2x8x32xf32, #tpu.memory_space<vmem>>, vector<2x8x32xf32>,
    } else {
    }
    %c0 = arith.constant 0 : index
    %c0_1 = arith.constant 0 : index
    %c0_2 = arith.constant 0 : index
    %3 = vector.load %arg16[%c0, %c0_1, %c0_2] : memref<2x8x32xf32, #tpu.memory_space<vmem>>, vector<2x8x32xf32>
    %4 = vector.shape_cast %3 : vector<2x8x32xf32> to vector<16x32xf32>
    %c0_3 = arith.constant 0 : index
    %c0_4 = arith.constant 0 : index
    %c0_5 = arith.constant 0 : index
    %5 = vector.load %arg4[%c0_3, %c0_4, %c0_5] : memref<1x1x32xf32, #tpu.memory_space<vmem>>, vector<1x1x32xf32>
    %6 = vector.shape_cast %5 : vector<1x1x32xf32> to vector<1x32xf32>
    %c0_6 = arith.constant 0 : index
    %c0_7 = arith.constant 0 : index
    %c0_8 = arith.constant 0 : index
    %7 = vector.load %arg5[%c0_6, %c0_7, %c0_8] : memref<1x1x32xf32, #tpu.memory_space<vmem>>, vector<1x1x32xf32>
    %8 = vector.shape_cast %7 : vector<1x1x32xf32> to vector<1x32xf32>
    %cst = arith.constant dense<0.000000e+00> : vector<16xf32>
    %9 = vector.multi_reduction <add>, %4, %cst [1] : vector<16x32xf32> to vector<16xf32>
    %10 = vector.shape_cast %9 : vector<16xf32> to vector<16x1xf32>
    %cst_9 = arith.constant 3.200000e+01 : f32
    %11 = vector.broadcast %cst_9 : f32 to vector<16x1xf32>
    %12 = arith.divf %10, %11 : vector<16x1xf32>
    %13 = vector.broadcast %12 : vector<16x1xf32> to vector<16x32xf32>
    %14 = arith.subf %4, %13 : vector<16x32xf32>
    %15 = arith.mulf %14, %14 : vector<16x32xf32>
    %cst_10 = arith.constant dense<0.000000e+00> : vector<16xf32>
    %16 = vector.multi_reduction <add>, %15, %cst_10 [1] : vector<16x32xf32> to vector<16xf32>
    %17 = vector.shape_cast %16 : vector<16xf32> to vector<16x1xf32>
    %cst_11 = arith.constant 3.200000e+01 : f32
    %18 = vector.broadcast %cst_11 : f32 to vector<16x1xf32>
    %19 = arith.divf %17, %18 : vector<16x1xf32>
    %20 = vector.broadcast %12 : vector<16x1xf32> to vector<16x32xf32>
    %21 = arith.subf %4, %20 : vector<16x32xf32>
    %cst_12 = arith.constant 9.99999974E-6 : f32
    %22 = vector.broadcast %cst_12 : f32 to vector<16x1xf32>
    %23 = arith.addf %19, %22 : vector<16x1xf32>
    %24 = math.rsqrt %23 : vector<16x1xf32>
    %25 = vector.broadcast %24 : vector<16x1xf32> to vector<16x32xf32>
    %26 = arith.mulf %21, %25 : vector<16x32xf32>
    %27 = vector.broadcast %6 : vector<1x32xf32> to vector<16x32xf32>
    %28 = arith.mulf %26, %27 : vector<16x32xf32>
    %29 = vector.broadcast %8 : vector<1x32xf32> to vector<16x32xf32>
    %30 = arith.addf %28, %29 : vector<16x32xf32>
    %31 = arith.truncf %30 : vector<16x32xf32> to vector<16x32xbf16>
    %c0_13 = arith.constant 0 : index
    %c0_14 = arith.constant 0 : index
    %c0_15 = arith.constant 0 : index
    %32 = vector.load %arg6[%c0_13, %c0_14, %c0_15] : memref<1x32x96xbf16, #tpu.memory_space<vmem>>, vector<1x32x96xbf16>
    %33 = vector.shape_cast %32 : vector<1x32x96xbf16> to vector<32x96xbf16>
    %cst_16 = arith.constant dense<0.000000e+00> : vector<16x96xf32>
    %34 = tpu.matmul %31, %33, %cst_16 {dimension_numbers = #tpu.dot_dimension_numbers<[1], [0], [0], [1], [0, 0, 1, 1], [], []>} : vector<16x32xbf16>, vector<32x96xbf16>, vector<16x96xf32> -> vector<16x96xf32>
    %c0_17 = arith.constant 0 : index
    %c0_18 = arith.constant 0 : index
    %c0_19 = arith.constant 0 : index
    %35 = vector.load %arg7[%c0_17, %c0_18, %c0_19] : memref<1x1x96xf32, #tpu.memory_space<vmem>>, vector<1x1x96xf32>
    %36 = vector.shape_cast %35 : vector<1x1x96xf32> to vector<1x96xf32>
    %37 = vector.broadcast %36 : vector<1x96xf32> to vector<16x96xf32>
    %38 = arith.addf %34, %37 : vector<16x96xf32>
    %39 = vector.extract_strided_slice %38 {offsets = [0, 0], sizes = [16, 32], strides = [1, 1]} : vector<16x96xf32> to vector<16x32xf32>
    %40 = vector.extract_strided_slice %38 {offsets = [0, 32], sizes = [16, 32], strides = [1, 1]} : vector<16x96xf32> to vector<16x32xf32>
    %41 = vector.extract_strided_slice %38 {offsets = [0, 64], sizes = [16, 32], strides = [1, 1]} : vector<16x96xf32> to vector<16x32xf32>
    %42 = tpu.iota {dimensions = array<i32: 0>} : vector<8x8xi32>
    %43 = tpu.iota {dimensions = array<i32: 1>} : vector<8x8xi32>
    %44 = arith.cmpi sle, %43, %42 : vector<8x8xi32>
    %cst_20 = arith.constant 0.000000e+00 : f32
    %cst_21 = arith.constant -1.000000e+30 : f32
    %45 = vector.broadcast %cst_20 : f32 to vector<8x8xf32>
    %46 = vector.broadcast %cst_21 : f32 to vector<8x8xf32>
    %47 = arith.select %44, %45, %46 : vector<8x8xi1>, vector<8x8xf32>
    %c0_22 = arith.constant 0 : index
    %c0_23 = arith.constant 0 : index
    %c0_24 = arith.constant 0 : index
    %c0_25 = arith.constant 0 : index
    %48 = vector.load %arg8[%c0_22, %c0_23, %c0_24, %c0_25] : memref<1x4x8x32xbf16, #tpu.memory_space<vmem>>, vector<1x4x8x32xbf16>
    %49 = vector.shape_cast %48 : vector<1x4x8x32xbf16> to vector<4x8x32xbf16>
    %50 = vector.extract_strided_slice %39 {offsets = [0, 0], sizes = [8, 8], strides = [1, 1]} : vector<16x32xf32> to vector<8x8xf32>
    %51 = vector.extract_strided_slice %39 {offsets = [0, 8], sizes = [8, 8], strides = [1, 1]} : vector<16x32xf32> to vector<8x8xf32>
    %52 = vector.extract_strided_slice %39 {offsets = [0, 16], sizes = [8, 8], strides = [1, 1]} : vector<16x32xf32> to vector<8x8xf32>
    %53 = vector.extract_strided_slice %39 {offsets = [0, 24], sizes = [8, 8], strides = [1, 1]} : vector<16x32xf32> to vector<8x8xf32>
    %54 = vector.shape_cast %50 : vector<8x8xf32> to vector<1x8x8xf32>
    %55 = vector.shape_cast %51 : vector<8x8xf32> to vector<1x8x8xf32>
    %56 = vector.shape_cast %52 : vector<8x8xf32> to vector<1x8x8xf32>
    %57 = vector.shape_cast %53 : vector<8x8xf32> to vector<1x8x8xf32>
    %58 = tpu.concatenate %54, %55, %56, %57 in 0 : vector<1x8x8xf32>, vector<1x8x8xf32>, vector<1x8x8xf32>, vector<1x8x8xf32> -> vector<4x8x8xf32>
    %59 = arith.truncf %58 : vector<4x8x8xf32> to vector<4x8x8xbf16>
    %60 = vector.extract_strided_slice %40 {offsets = [0, 0], sizes = [8, 8], strides = [1, 1]} : vector<16x32xf32> to vector<8x8xf32>
    %61 = vector.extract_strided_slice %40 {offsets = [0, 8], sizes = [8, 8], strides = [1, 1]} : vector<16x32xf32> to vector<8x8xf32>
    %62 = vector.extract_strided_slice %40 {offsets = [0, 16], sizes = [8, 8], strides = [1, 1]} : vector<16x32xf32> to vector<8x8xf32>
    %63 = vector.extract_strided_slice %40 {offsets = [0, 24], sizes = [8, 8], strides = [1, 1]} : vector<16x32xf32> to vector<8x8xf32>
    %64 = vector.shape_cast %60 : vector<8x8xf32> to vector<1x8x8xf32>
    %65 = vector.shape_cast %61 : vector<8x8xf32> to vector<1x8x8xf32>
    %66 = vector.shape_cast %62 : vector<8x8xf32> to vector<1x8x8xf32>
    %67 = vector.shape_cast %63 : vector<8x8xf32> to vector<1x8x8xf32>
    %68 = tpu.concatenate %64, %65, %66, %67 in 0 : vector<1x8x8xf32>, vector<1x8x8xf32>, vector<1x8x8xf32>, vector<1x8x8xf32> -> vector<4x8x8xf32>
    %69 = arith.truncf %68 : vector<4x8x8xf32> to vector<4x8x8xbf16>
    %70 = vector.extract_strided_slice %41 {offsets = [0, 0], sizes = [8, 8], strides = [1, 1]} : vector<16x32xf32> to vector<8x8xf32>
    %71 = vector.extract_strided_slice %41 {offsets = [0, 8], sizes = [8, 8], strides = [1, 1]} : vector<16x32xf32> to vector<8x8xf32>
    %72 = vector.extract_strided_slice %41 {offsets = [0, 16], sizes = [8, 8], strides = [1, 1]} : vector<16x32xf32> to vector<8x8xf32>
    %73 = vector.extract_strided_slice %41 {offsets = [0, 24], sizes = [8, 8], strides = [1, 1]} : vector<16x32xf32> to vector<8x8xf32>
    %74 = vector.shape_cast %70 : vector<8x8xf32> to vector<1x8x8xf32>
    %75 = vector.shape_cast %71 : vector<8x8xf32> to vector<1x8x8xf32>
    %76 = vector.shape_cast %72 : vector<8x8xf32> to vector<1x8x8xf32>
    %77 = vector.shape_cast %73 : vector<8x8xf32> to vector<1x8x8xf32>
    %78 = tpu.concatenate %74, %75, %76, %77 in 0 : vector<1x8x8xf32>, vector<1x8x8xf32>, vector<1x8x8xf32>, vector<1x8x8xf32> -> vector<4x8x8xf32>
    %79 = arith.truncf %78 : vector<4x8x8xf32> to vector<4x8x8xbf16>
    "tpu.trace_start"() <{level = 10 : i32, message = "hqd,hkd->hqk"}> : () -> ()
    %cst_26 = arith.constant dense<0.000000e+00> : vector<4x8x8xf32>
    %80 = tpu.matmul %59, %69, %cst_26 {dimension_numbers = #tpu.dot_dimension_numbers<[2], [2], [1], [1], [0, 0, 0, 1, 1, 1], [0], [0]>} : vector<4x8x8xbf16>, vector<4x8x8xbf16>, vector<4x8x8xf32> -> vector<4x8x8xf32>
    "tpu.trace_stop"() : () -> ()
    %81 = vector.shape_cast %47 : vector<8x8xf32> to vector<1x8x8xf32>
    %82 = vector.broadcast %81 : vector<1x8x8xf32> to vector<4x8x8xf32>
    %83 = arith.addf %80, %82 : vector<4x8x8xf32>
    %cst_27 = arith.constant dense<0xFF800000> : vector<4x8xf32>
    %84 = vector.multi_reduction <maximumf>, %83, %cst_27 [2] : vector<4x8x8xf32> to vector<4x8xf32>
    %85 = vector.shape_cast %84 : vector<4x8xf32> to vector<4x8x1xf32>
    %86 = vector.broadcast %85 : vector<4x8x1xf32> to vector<4x8x8xf32>
    %87 = arith.subf %83, %86 : vector<4x8x8xf32>
    %88 = math.exp %87 : vector<4x8x8xf32>
    %cst_28 = arith.constant dense<0.000000e+00> : vector<4x8xf32>
    %89 = vector.multi_reduction <add>, %88, %cst_28 [2] : vector<4x8x8xf32> to vector<4x8xf32>
    %90 = vector.shape_cast %89 : vector<4x8xf32> to vector<4x8x1xf32>
    %91 = tpu.reciprocal %90 {approx = true} : vector<4x8x1xf32> -> vector<4x8x1xf32>
    %92 = vector.broadcast %91 : vector<4x8x1xf32> to vector<4x8x8xf32>
    %93 = arith.mulf %88, %92 : vector<4x8x8xf32>
    %94 = arith.truncf %93 : vector<4x8x8xf32> to vector<4x8x8xbf16>
    "tpu.trace_start"() <{level = 10 : i32, message = "hqk,hkd->hqd"}> : () -> ()
    %cst_29 = arith.constant dense<0.000000e+00> : vector<4x8x8xf32>
    %95 = tpu.matmul %94, %79, %cst_29 {dimension_numbers = #tpu.dot_dimension_numbers<[2], [1], [1], [2], [0, 0, 0, 1, 1, 2], [0], [0]>} : vector<4x8x8xbf16>, vector<4x8x8xbf16>, vector<4x8x8xf32> -> vector<4x8x8xf32>
    "tpu.trace_stop"() : () -> ()
    %96 = arith.truncf %95 : vector<4x8x8xf32> to vector<4x8x8xbf16>
    "tpu.trace_start"() <{level = 10 : i32, message = "hqd,hde->hqe"}> : () -> ()
    %cst_30 = arith.constant dense<0.000000e+00> : vector<4x8x32xf32>
    %97 = tpu.matmul %96, %49, %cst_30 {dimension_numbers = #tpu.dot_dimension_numbers<[2], [1], [1], [2], [0, 0, 0, 1, 1, 2], [0], [0]>} : vector<4x8x8xbf16>, vector<4x8x32xbf16>, vector<4x8x32xf32> -> vector<4x8x32xf32>
    "tpu.trace_stop"() : () -> ()
    %cst_31 = arith.constant dense<0.000000e+00> : vector<8x32xf32>
    %98 = vector.multi_reduction <add>, %97, %cst_31 [0] : vector<4x8x32xf32> to vector<8x32xf32>
    %99 = vector.extract_strided_slice %39 {offsets = [8, 0], sizes = [8, 8], strides = [1, 1]} : vector<16x32xf32> to vector<8x8xf32>
    %100 = vector.extract_strided_slice %39 {offsets = [8, 8], sizes = [8, 8], strides = [1, 1]} : vector<16x32xf32> to vector<8x8xf32>
    %101 = vector.extract_strided_slice %39 {offsets = [8, 16], sizes = [8, 8], strides = [1, 1]} : vector<16x32xf32> to vector<8x8xf32>
    %102 = vector.extract_strided_slice %39 {offsets = [8, 24], sizes = [8, 8], strides = [1, 1]} : vector<16x32xf32> to vector<8x8xf32>
    %103 = vector.shape_cast %99 : vector<8x8xf32> to vector<1x8x8xf32>
    %104 = vector.shape_cast %100 : vector<8x8xf32> to vector<1x8x8xf32>
    %105 = vector.shape_cast %101 : vector<8x8xf32> to vector<1x8x8xf32>
    %106 = vector.shape_cast %102 : vector<8x8xf32> to vector<1x8x8xf32>
    %107 = tpu.concatenate %103, %104, %105, %106 in 0 : vector<1x8x8xf32>, vector<1x8x8xf32>, vector<1x8x8xf32>, vector<1x8x8xf32> -> vector<4x8x8xf32>
    %108 = arith.truncf %107 : vector<4x8x8xf32> to vector<4x8x8xbf16>
    %109 = vector.extract_strided_slice %40 {offsets = [8, 0], sizes = [8, 8], strides = [1, 1]} : vector<16x32xf32> to vector<8x8xf32>
    %110 = vector.extract_strided_slice %40 {offsets = [8, 8], sizes = [8, 8], strides = [1, 1]} : vector<16x32xf32> to vector<8x8xf32>
    %111 = vector.extract_strided_slice %40 {offsets = [8, 16], sizes = [8, 8], strides = [1, 1]} : vector<16x32xf32> to vector<8x8xf32>
    %112 = vector.extract_strided_slice %40 {offsets = [8, 24], sizes = [8, 8], strides = [1, 1]} : vector<16x32xf32> to vector<8x8xf32>
    %113 = vector.shape_cast %109 : vector<8x8xf32> to vector<1x8x8xf32>
    %114 = vector.shape_cast %110 : vector<8x8xf32> to vector<1x8x8xf32>
    %115 = vector.shape_cast %111 : vector<8x8xf32> to vector<1x8x8xf32>
    %116 = vector.shape_cast %112 : vector<8x8xf32> to vector<1x8x8xf32>
    %117 = tpu.concatenate %113, %114, %115, %116 in 0 : vector<1x8x8xf32>, vector<1x8x8xf32>, vector<1x8x8xf32>, vector<1x8x8xf32> -> vector<4x8x8xf32>
    %118 = arith.truncf %117 : vector<4x8x8xf32> to vector<4x8x8xbf16>
    %119 = vector.extract_strided_slice %41 {offsets = [8, 0], sizes = [8, 8], strides = [1, 1]} : vector<16x32xf32> to vector<8x8xf32>
    %120 = vector.extract_strided_slice %41 {offsets = [8, 8], sizes = [8, 8], strides = [1, 1]} : vector<16x32xf32> to vector<8x8xf32>
    %121 = vector.extract_strided_slice %41 {offsets = [8, 16], sizes = [8, 8], strides = [1, 1]} : vector<16x32xf32> to vector<8x8xf32>
    %122 = vector.extract_strided_slice %41 {offsets = [8, 24], sizes = [8, 8], strides = [1, 1]} : vector<16x32xf32> to vector<8x8xf32>
    %123 = vector.shape_cast %119 : vector<8x8xf32> to vector<1x8x8xf32>
    %124 = vector.shape_cast %120 : vector<8x8xf32> to vector<1x8x8xf32>
    %125 = vector.shape_cast %121 : vector<8x8xf32> to vector<1x8x8xf32>
    %126 = vector.shape_cast %122 : vector<8x8xf32> to vector<1x8x8xf32>
    %127 = tpu.concatenate %123, %124, %125, %126 in 0 : vector<1x8x8xf32>, vector<1x8x8xf32>, vector<1x8x8xf32>, vector<1x8x8xf32> -> vector<4x8x8xf32>
    %128 = arith.truncf %127 : vector<4x8x8xf32> to vector<4x8x8xbf16>
    "tpu.trace_start"() <{level = 10 : i32, message = "hqd,hkd->hqk"}> : () -> ()
    %cst_32 = arith.constant dense<0.000000e+00> : vector<4x8x8xf32>
    %129 = tpu.matmul %108, %118, %cst_32 {dimension_numbers = #tpu.dot_dimension_numbers<[2], [2], [1], [1], [0, 0, 0, 1, 1, 1], [0], [0]>} : vector<4x8x8xbf16>, vector<4x8x8xbf16>, vector<4x8x8xf32> -> vector<4x8x8xf32>
    "tpu.trace_stop"() : () -> ()
    %130 = vector.shape_cast %47 : vector<8x8xf32> to vector<1x8x8xf32>
    %131 = vector.broadcast %130 : vector<1x8x8xf32> to vector<4x8x8xf32>
    %132 = arith.addf %129, %131 : vector<4x8x8xf32>
    %cst_33 = arith.constant dense<0xFF800000> : vector<4x8xf32>
    %133 = vector.multi_reduction <maximumf>, %132, %cst_33 [2] : vector<4x8x8xf32> to vector<4x8xf32>
    %134 = vector.shape_cast %133 : vector<4x8xf32> to vector<4x8x1xf32>
    %135 = vector.broadcast %134 : vector<4x8x1xf32> to vector<4x8x8xf32>
    %136 = arith.subf %132, %135 : vector<4x8x8xf32>
    %137 = math.exp %136 : vector<4x8x8xf32>
    %cst_34 = arith.constant dense<0.000000e+00> : vector<4x8xf32>
    %138 = vector.multi_reduction <add>, %137, %cst_34 [2] : vector<4x8x8xf32> to vector<4x8xf32>
    %139 = vector.shape_cast %138 : vector<4x8xf32> to vector<4x8x1xf32>
    %140 = tpu.reciprocal %139 {approx = true} : vector<4x8x1xf32> -> vector<4x8x1xf32>
    %141 = vector.broadcast %140 : vector<4x8x1xf32> to vector<4x8x8xf32>
    %142 = arith.mulf %137, %141 : vector<4x8x8xf32>
    %143 = arith.truncf %142 : vector<4x8x8xf32> to vector<4x8x8xbf16>
    "tpu.trace_start"() <{level = 10 : i32, message = "hqk,hkd->hqd"}> : () -> ()
    %cst_35 = arith.constant dense<0.000000e+00> : vector<4x8x8xf32>
    %144 = tpu.matmul %143, %128, %cst_35 {dimension_numbers = #tpu.dot_dimension_numbers<[2], [1], [1], [2], [0, 0, 0, 1, 1, 2], [0], [0]>} : vector<4x8x8xbf16>, vector<4x8x8xbf16>, vector<4x8x8xf32> -> vector<4x8x8xf32>
    "tpu.trace_stop"() : () -> ()
    %145 = arith.truncf %144 : vector<4x8x8xf32> to vector<4x8x8xbf16>
    "tpu.trace_start"() <{level = 10 : i32, message = "hqd,hde->hqe"}> : () -> ()
    %cst_36 = arith.constant dense<0.000000e+00> : vector<4x8x32xf32>
    %146 = tpu.matmul %145, %49, %cst_36 {dimension_numbers = #tpu.dot_dimension_numbers<[2], [1], [1], [2], [0, 0, 0, 1, 1, 2], [0], [0]>} : vector<4x8x8xbf16>, vector<4x8x32xbf16>, vector<4x8x32xf32> -> vector<4x8x32xf32>
    "tpu.trace_stop"() : () -> ()
    %cst_37 = arith.constant dense<0.000000e+00> : vector<8x32xf32>
    %147 = vector.multi_reduction <add>, %146, %cst_37 [0] : vector<4x8x32xf32> to vector<8x32xf32>
    %148 = tpu.concatenate %98, %147 in 0 : vector<8x32xf32>, vector<8x32xf32> -> vector<16x32xf32>
    %149 = arith.addf %4, %148 : vector<16x32xf32>
    %c0_38 = arith.constant 0 : index
    %c0_39 = arith.constant 0 : index
    %c0_40 = arith.constant 0 : index
    %150 = vector.load %arg9[%c0_38, %c0_39, %c0_40] : memref<1x1x32xf32, #tpu.memory_space<vmem>>, vector<1x1x32xf32>
    %151 = vector.shape_cast %150 : vector<1x1x32xf32> to vector<1x32xf32>
    %152 = vector.broadcast %151 : vector<1x32xf32> to vector<16x32xf32>
    %153 = arith.addf %149, %152 : vector<16x32xf32>
    %c0_41 = arith.constant 0 : index
    %c0_42 = arith.constant 0 : index
    %c0_43 = arith.constant 0 : index
    %154 = vector.load %arg10[%c0_41, %c0_42, %c0_43] : memref<1x1x32xf32, #tpu.memory_space<vmem>>, vector<1x1x32xf32>
    %155 = vector.shape_cast %154 : vector<1x1x32xf32> to vector<1x32xf32>
    %c0_44 = arith.constant 0 : index
    %c0_45 = arith.constant 0 : index
    %c0_46 = arith.constant 0 : index
    %156 = vector.load %arg11[%c0_44, %c0_45, %c0_46] : memref<1x1x32xf32, #tpu.memory_space<vmem>>, vector<1x1x32xf32>
    %157 = vector.shape_cast %156 : vector<1x1x32xf32> to vector<1x32xf32>
    %cst_47 = arith.constant dense<0.000000e+00> : vector<16xf32>
    %158 = vector.multi_reduction <add>, %153, %cst_47 [1] : vector<16x32xf32> to vector<16xf32>
    %159 = vector.shape_cast %158 : vector<16xf32> to vector<16x1xf32>
    %cst_48 = arith.constant 3.200000e+01 : f32
    %160 = vector.broadcast %cst_48 : f32 to vector<16x1xf32>
    %161 = arith.divf %159, %160 : vector<16x1xf32>
    %162 = vector.broadcast %161 : vector<16x1xf32> to vector<16x32xf32>
    %163 = arith.subf %153, %162 : vector<16x32xf32>
    %164 = arith.mulf %163, %163 : vector<16x32xf32>
    %cst_49 = arith.constant dense<0.000000e+00> : vector<16xf32>
    %165 = vector.multi_reduction <add>, %164, %cst_49 [1] : vector<16x32xf32> to vector<16xf32>
    %166 = vector.shape_cast %165 : vector<16xf32> to vector<16x1xf32>
    %cst_50 = arith.constant 3.200000e+01 : f32
    %167 = vector.broadcast %cst_50 : f32 to vector<16x1xf32>
    %168 = arith.divf %166, %167 : vector<16x1xf32>
    %169 = vector.broadcast %161 : vector<16x1xf32> to vector<16x32xf32>
    %170 = arith.subf %153, %169 : vector<16x32xf32>
    %cst_51 = arith.constant 9.99999974E-6 : f32
    %171 = vector.broadcast %cst_51 : f32 to vector<16x1xf32>
    %172 = arith.addf %168, %171 : vector<16x1xf32>
    %173 = math.rsqrt %172 : vector<16x1xf32>
    %174 = vector.broadcast %173 : vector<16x1xf32> to vector<16x32xf32>
    %175 = arith.mulf %170, %174 : vector<16x32xf32>
    %176 = vector.broadcast %155 : vector<1x32xf32> to vector<16x32xf32>
    %177 = arith.mulf %175, %176 : vector<16x32xf32>
    %178 = vector.broadcast %157 : vector<1x32xf32> to vector<16x32xf32>
    %179 = arith.addf %177, %178 : vector<16x32xf32>
    %180 = arith.truncf %179 : vector<16x32xf32> to vector<16x32xbf16>
    %c0_52 = arith.constant 0 : index
    %c0_53 = arith.constant 0 : index
    %c0_54 = arith.constant 0 : index
    %181 = vector.load %arg12[%c0_52, %c0_53, %c0_54] : memref<1x32x128xbf16, #tpu.memory_space<vmem>>, vector<1x32x128xbf16>
    %182 = vector.shape_cast %181 : vector<1x32x128xbf16> to vector<32x128xbf16>
    %cst_55 = arith.constant dense<0.000000e+00> : vector<16x128xf32>
    %183 = tpu.matmul %180, %182, %cst_55 {dimension_numbers = #tpu.dot_dimension_numbers<[1], [0], [0], [1], [0, 0, 1, 1], [], []>} : vector<16x32xbf16>, vector<32x128xbf16>, vector<16x128xf32> -> vector<16x128xf32>
    %c0_56 = arith.constant 0 : index
    %c0_57 = arith.constant 0 : index
    %c0_58 = arith.constant 0 : index
    %184 = vector.load %arg13[%c0_56, %c0_57, %c0_58] : memref<1x1x128xf32, #tpu.memory_space<vmem>>, vector<1x1x128xf32>
    %185 = vector.shape_cast %184 : vector<1x1x128xf32> to vector<1x128xf32>
    %186 = vector.broadcast %185 : vector<1x128xf32> to vector<16x128xf32>
    %187 = arith.addf %183, %186 : vector<16x128xf32>
    %cst_59 = arith.constant 1.702000e+00 : f32
    %188 = vector.broadcast %cst_59 : f32 to vector<16x128xf32>
    %189 = arith.mulf %188, %187 : vector<16x128xf32>
    %190 = arith.negf %189 : vector<16x128xf32>
    %191 = math.exp %190 : vector<16x128xf32>
    %cst_60 = arith.constant 1.000000e+00 : f32
    %192 = vector.broadcast %cst_60 : f32 to vector<16x128xf32>
    %193 = arith.addf %192, %191 : vector<16x128xf32>
    %194 = arith.divf %192, %193 : vector<16x128xf32>
    %195 = arith.mulf %187, %194 : vector<16x128xf32>
    %196 = arith.truncf %195 : vector<16x128xf32> to vector<16x128xbf16>
    %c0_61 = arith.constant 0 : index
    %c0_62 = arith.constant 0 : index
    %c0_63 = arith.constant 0 : index
    %197 = vector.load %arg14[%c0_61, %c0_62, %c0_63] : memref<1x128x32xbf16, #tpu.memory_space<vmem>>, vector<1x128x32xbf16>
    %198 = vector.shape_cast %197 : vector<1x128x32xbf16> to vector<128x32xbf16>
    %cst_64 = arith.constant dense<0.000000e+00> : vector<16x32xf32>
    %199 = tpu.matmul %196, %198, %cst_64 {dimension_numbers = #tpu.dot_dimension_numbers<[1], [0], [0], [1], [0, 0, 1, 1], [], []>} : vector<16x128xbf16>, vector<128x32xbf16>, vector<16x32xf32> -> vector<16x32xf32>
    %c0_65 = arith.constant 0 : index
    %c0_66 = arith.constant 0 : index
    %c0_67 = arith.constant 0 : index
    %200 = vector.load %arg15[%c0_65, %c0_66, %c0_67] : memref<1x1x32xf32, #tpu.memory_space<vmem>>, vector<1x1x32xf32>
    %201 = vector.shape_cast %200 : vector<1x1x32xf32> to vector<1x32xf32>
    %202 = vector.broadcast %201 : vector<1x32xf32> to vector<16x32xf32>
    %203 = arith.addf %199, %202 : vector<16x32xf32>
    %204 = arith.addf %153, %203 : vector<16x32xf32>
    %205 = vector.shape_cast %204 : vector<16x32xf32> to vector<2x8x32xf32>
    %c0_68 = arith.constant 0 : index
    %c0_69 = arith.constant 0 : index
    %c0_70 = arith.constant 0 : index
    %206 = vector.load %arg16[%c0_68, %c0_69, %c0_70] : memref<2x8x32xf32, #tpu.memory_space<vmem>>, vector<2x8x32xf32>
    tpu.vector_store %arg16[%c0_68, %c0_69, %c0_70], %205 {strides = array<i32>} : memref<2x8x32xf32, #tpu.memory_space<vmem>>, vector<2x8x32xf32>,
    return
  }
  func.func @transform_0(%arg0: i32, %arg1: i32) -> (i32, i32, i32) {
    %c0_i32 = arith.constant 0 : i32
    %c0_i32_0 = arith.constant 0 : i32
    %c0_i32_1 = arith.constant 0 : i32
    return %arg0, %c0_i32, %c0_i32_0 : i32, i32, i32
  }
  func.func @transform_1(%arg0: i32, %arg1: i32) -> (i32, i32) {
    %c0_i32 = arith.constant 0 : i32
    %c0_i32_0 = arith.constant 0 : i32
    %c0_i32_1 = arith.constant 0 : i32
    return %c0_i32, %c0_i32_0 : i32, i32
  }
  func.func @transform_2(%arg0: i32, %arg1: i32) -> (i32, i32, i32) {
    %c0_i32 = arith.constant 0 : i32
    %c0_i32_0 = arith.constant 0 : i32
    %c0_i32_1 = arith.constant 0 : i32
    return %arg1, %c0_i32, %c0_i32_0 : i32, i32, i32
  }
  func.func @transform_3(%arg0: i32, %arg1: i32) -> (i32, i32, i32) {
    %c0_i32 = arith.constant 0 : i32
    %c0_i32_0 = arith.constant 0 : i32
    %c0_i32_1 = arith.constant 0 : i32
    return %arg1, %c0_i32, %c0_i32_0 : i32, i32, i32
  }
  func.func @transform_4(%arg0: i32, %arg1: i32) -> (i32, i32, i32) {
    %c0_i32 = arith.constant 0 : i32
    %c0_i32_0 = arith.constant 0 : i32
    %c0_i32_1 = arith.constant 0 : i32
    return %arg1, %c0_i32, %c0_i32_0 : i32, i32, i32
  }
  func.func @transform_5(%arg0: i32, %arg1: i32) -> (i32, i32, i32) {
    %c0_i32 = arith.constant 0 : i32
    %c0_i32_0 = arith.constant 0 : i32
    %c0_i32_1 = arith.constant 0 : i32
    return %arg1, %c0_i32, %c0_i32_0 : i32, i32, i32
  }
  func.func @transform_6(%arg0: i32, %arg1: i32) -> (i32, i32, i32, i32) {
    %c0_i32 = arith.constant 0 : i32
    %c0_i32_0 = arith.constant 0 : i32
    %c0_i32_1 = arith.constant 0 : i32
    %c0_i32_2 = arith.constant 0 : i32
    return %arg1, %c0_i32, %c0_i32_0, %c0_i32_1 : i32, i32, i32, i32
  }
  func.func @transform_7(%arg0: i32, %arg1: i32) -> (i32, i32, i32) {
    %c0_i32 = arith.constant 0 : i32
    %c0_i32_0 = arith.constant 0 : i32
    %c0_i32_1 = arith.constant 0 : i32
    return %arg1, %c0_i32, %c0_i32_0 : i32, i32, i32
  }
  func.func @transform_8(%arg0: i32, %arg1: i32) -> (i32, i32, i32) {
    %c0_i32 = arith.constant 0 : i32
    %c0_i32_0 = arith.constant 0 : i32
    %c0_i32_1 = arith.constant 0 : i32
    return %arg1, %c0_i32, %c0_i32_0 : i32, i32, i32
  }
  func.func @transform_9(%arg0: i32, %arg1: i32) -> (i32, i32, i32) {
    %c0_i32 = arith.constant 0 : i32
    %c0_i32_0 = arith.constant 0 : i32
    %c0_i32_1 = arith.constant 0 : i32
    return %arg1, %c0_i32, %c0_i32_0 : i32, i32, i32
  }
  func.func @transform_10(%arg0: i32, %arg1: i32) -> (i32, i32, i32) {
    %c0_i32 = arith.constant 0 : i32
    %c0_i32_0 = arith.constant 0 : i32
    %c0_i32_1 = arith.constant 0 : i32
    return %arg1, %c0_i32, %c0_i32_0 : i32, i32, i32
  }
  func.func @transform_11(%arg0: i32, %arg1: i32) -> (i32, i32, i32) {
    %c0_i32 = arith.constant 0 : i32
    %c0_i32_0 = arith.constant 0 : i32
    %c0_i32_1 = arith.constant 0 : i32
    return %arg1, %c0_i32, %c0_i32_0 : i32, i32, i32
  }
  func.func @transform_12(%arg0: i32, %arg1: i32) -> (i32, i32, i32) {
    %c0_i32 = arith.constant 0 : i32
    %c0_i32_0 = arith.constant 0 : i32
    %c0_i32_1 = arith.constant 0 : i32
    return %arg1, %c0_i32, %c0_i32_0 : i32, i32, i32
  }
  func.func @transform_13(%arg0: i32, %arg1: i32) -> (i32, i32, i32) {
    %c0_i32 = arith.constant 0 : i32
    %c0_i32_0 = arith.constant 0 : i32
    %c0_i32_1 = arith.constant 0 : i32
    return %arg1, %c0_i32, %c0_i32_0 : i32, i32, i32
  }
  func.func @transform_14(%arg0: i32, %arg1: i32) -> (i32, i32, i32) {
    %c0_i32 = arith.constant 0 : i32
    %c0_i32_0 = arith.constant 0 : i32
    %c0_i32_1 = arith.constant 0 : i32
    return %arg0, %c0_i32, %c0_i32_0 : i32, i32, i32
  }
}

</mosaic_0001>

<llo_original>
// kernel: tpu_custom_call.1
$region0: #{tpu_custom_call.1}
  #allocation0 [shape = 'u32[]', space=smem, size = 0x4, offset = 0x4, fixed_abs, tag = 'smem constant byte address 0x4 - core index']
  #allocation1 [shape = 'u32[144,128]{1,0:T(1,128)}', space=vmem, size = 0x12000, scoped, tag = 'internal scratch']
  %s0 = inlined_call_operand.vmem [shape: f32[2,8,32], index: 0, kind: input, shape index: {}]
  %s1 = inlined_call_operand.vmem [shape: f32[8,32], index: 1, kind: input, shape index: {}]
  %s2 = inlined_call_operand.vmem [shape: f32[2,1,32], index: 2, kind: input, shape index: {}]
  %s3 = inlined_call_operand.vmem [shape: f32[2,1,32], index: 3, kind: input, shape index: {}]
  %s4 = inlined_call_operand.vmem [shape: bf16[2,32,96], index: 4, kind: input, shape index: {}]
  %s5 = inlined_call_operand.vmem [shape: f32[2,1,96], index: 5, kind: input, shape index: {}]
  %s6 = inlined_call_operand.vmem [shape: bf16[2,4,8,32], index: 6, kind: input, shape index: {}]
  %s7 = inlined_call_operand.vmem [shape: f32[2,1,32], index: 7, kind: input, shape index: {}]
  %s8 = inlined_call_operand.vmem [shape: f32[2,1,32], index: 8, kind: input, shape index: {}]
  %s9 = inlined_call_operand.vmem [shape: f32[2,1,32], index: 9, kind: input, shape index: {}]
  %s10 = inlined_call_operand.vmem [shape: bf16[2,32,128], index: 10, kind: input, shape index: {}]
  %s11 = inlined_call_operand.vmem [shape: f32[2,1,128], index: 11, kind: input, shape index: {}]
  %s12 = inlined_call_operand.vmem [shape: bf16[2,128,32], index: 12, kind: input, shape index: {}]
  %s13 = inlined_call_operand.vmem [shape: f32[2,1,32], index: 13, kind: input, shape index: {}]
  %s14 = inlined_call_operand.hbm [shape: f32[2,8,32], index: 14, kind: output, shape index: {}]
  %s15 = sld [smem:[#allocation0]]
  $region93: #{tpu_custom_call.1} parent=0
    _
  %s17 = ssub.s32 1, %s15
  %s18 = scalar_select 0, %s17, %s15
  $region1: #{tpu_custom_call.1} parent=0
    #allocation2 [shape = 'u8[8192]{0}', space=vmem, size = 0x2000, scoped, tag = 'output window, operand 0, single buffered']
    #allocation3 [shape = 's32[2]{0}', space=sflag, size = 0x8, scoped, tag = 'scoped memory for tpu_custom_call.1']
    %19 = vsyncpa [#allocation3], 0
    loop: start=0, step=1, limit=4
    $region2: #{tpu_custom_call.1} parent=1 // loop_pre_header
      _
    $region3: #{tpu_custom_call.1} parent=1 // loop_header
      %s21 = sphi 0, %s25
      %p22 = scmp.ge.s32.totalorder %s21, 4
      %s28 = sphi 0, %s40
      %s29 = sphi 0, %s36
      %s30 = sphi 0, %s28
      %s31 = sphi 0, %s29
      %s32 = sphi 0, %s30
      %s33 = sphi 0, %s31
      %s43 = sphi 0, %s45
      %s46 = sphi 0, %s43
      %s47 = sphi 0, %s46
      %s63 = sphi 0, %s47
      %s67 = sphi 0, %s67
      %s69 = sphi 0, %s67
      %s70 = sphi 0, %s69
      %s84 = sphi 0, %s70
      %s90 = sphi 0, %s92
      %s93 = sphi 0, %s90
      %s94 = sphi 0, %s93
      %s110 = sphi 0, %s94
      %s116 = sphi 0, %s118
      %s119 = sphi 0, %s116
      %s120 = sphi 0, %s119
      %s136 = sphi 0, %s120
      %s142 = sphi 0, %s144
      %s145 = sphi 0, %s142
      %s146 = sphi 0, %s145
      %s162 = sphi 0, %s146
      %s168 = sphi 0, %s170
      %s171 = sphi 0, %s168
      %s172 = sphi 0, %s171
      %s188 = sphi 0, %s172
      %s194 = sphi 0, %s196
      %s197 = sphi 0, %s194
      %s198 = sphi 0, %s197
      %s214 = sphi 0, %s198
      %s220 = sphi 0, %s222
      %s223 = sphi 0, %s220
      %s224 = sphi 0, %s223
      %s240 = sphi 0, %s224
      %s246 = sphi 0, %s248
      %s249 = sphi 0, %s246
      %s250 = sphi 0, %s249
      %s266 = sphi 0, %s250
      %s272 = sphi 0, %s274
      %s275 = sphi 0, %s272
      %s276 = sphi 0, %s275
      %s292 = sphi 0, %s276
      %s298 = sphi 0, %s300
      %s301 = sphi 0, %s298
      %s302 = sphi 0, %s301
      %s318 = sphi 0, %s302
      %s324 = sphi 0, %s326
      %s327 = sphi 0, %s324
      %s328 = sphi 0, %s327
      %s344 = sphi 0, %s328
      %s350 = sphi 0, %s352
      %s353 = sphi 0, %s350
      %s354 = sphi 0, %s353
      %s370 = sphi 0, %s354
      %s376 = sphi 0, %s378
      %s379 = sphi 0, %s376
      %s380 = sphi 0, %s379
      %s396 = sphi 0, %s380
      %s402 = sphi 0, %s404
      %s405 = sphi 0, %s402
      %s406 = sphi 0, %s405
      %s422 = sphi 0, %s406
    $region4: #{tpu_custom_call.1} parent=1 // loop_header_branch
      %24 = sbr.rel (%p22) target = $region8
    $region5: #{tpu_custom_call.1} parent=1 // loop_body
      %s26 = ssub.s32 %s21, 1
      %s27 = ssub.s32 %s21, 2
      %s34 = sadd.s32 1, %s29
      %p35 = scmp.ge.s32.totalorder %s34, 2
      %s36 = scalar_select %p35, 0, %s34
      %s37 = sadd.s32 1, %s28
      %s38 = scalar_select %p35, %s37, %s28
      %p39 = scmp.ge.s32.totalorder %s38, 1
      %s40 = scalar_select %p39, 0, %s38
      %s41 = ssub.s32 %s28, %s40
      %p42 = scmp.eq.s32.totalorder %s41, 0
      %s44 = sadd.s32 %s43, 1
      %s45 = scalar_select %p42, %s43, %s44
      %p48 = pneg %p42
      %p49 = scmp.eq.s32.totalorder %s21, 1
      %p50 = por %p48, %p49
      %p51 = scmp.ne.s32.totalorder %s43, %s46
      %p52 = scmp.eq.s32.totalorder %s21, 0
      %p53 = por %p51, %p52
      %p54 = scmp.ne.s32.totalorder %s43, %s46
      %p55 = scmp.eq.s32.totalorder %s26, 1
      %p56 = por %p54, %p55
      %p57 = scmp.ne.s32.totalorder %s46, %s47
      %p58 = scmp.eq.s32.totalorder %s26, 0
      %p59 = por %p57, %p58
      %p60 = scmp.ne.s32.totalorder %s46, %s47
      %p61 = scmp.eq.s32.totalorder %s27, 1
      %p62 = por %p60, %p61
      %p64 = scmp.ne.s32.totalorder %s47, %s63
      %p65 = scmp.eq.s32.totalorder %s27, 0
      %p66 = por %p64, %p65
      %s68 = sadd.s32 %s67, 1
      %p71 = scmp.eq.s32.totalorder %s21, 1
      %p72 = scmp.ne.s32.totalorder %s67, %s69
      %p73 = scmp.eq.s32.totalorder %s21, 0
      %p74 = por %p72, %p73
      %p75 = scmp.ne.s32.totalorder %s67, %s69
      %p76 = scmp.eq.s32.totalorder %s26, 1
      %p77 = por %p75, %p76
      %p78 = scmp.ne.s32.totalorder %s69, %s70
      %p79 = scmp.eq.s32.totalorder %s26, 0
      %p80 = por %p78, %p79
      %p81 = scmp.ne.s32.totalorder %s69, %s70
      %p82 = scmp.eq.s32.totalorder %s27, 1
      %p83 = por %p81, %p82
      %p85 = scmp.ne.s32.totalorder %s70, %s84
      %p86 = scmp.eq.s32.totalorder %s27, 0
      %p87 = por %p85, %p86
      %s88 = ssub.s32 %s29, %s36
      %p89 = scmp.eq.s32.totalorder %s88, 0
      %s91 = sadd.s32 %s90, 1
      %s92 = scalar_select %p89, %s90, %s91
      %p95 = pneg %p89
      %p96 = scmp.eq.s32.totalorder %s21, 1
      %p97 = por %p95, %p96
      %p98 = scmp.ne.s32.totalorder %s90, %s93
      %p99 = scmp.eq.s32.totalorder %s21, 0
      %p100 = por %p98, %p99
      %p101 = scmp.ne.s32.totalorder %s90, %s93
      %p102 = scmp.eq.s32.totalorder %s26, 1
      %p103 = por %p101, %p102
      %p104 = scmp.ne.s32.totalorder %s93, %s94
      %p105 = scmp.eq.s32.totalorder %s26, 0
      %p106 = por %p104, %p105
      %p107 = scmp.ne.s32.totalorder %s93, %s94
      %p108 = scmp.eq.s32.totalorder %s27, 1
      %p109 = por %p107, %p108
      %p111 = scmp.ne.s32.totalorder %s94, %s110
      %p112 = scmp.eq.s32.totalorder %s27, 0
      %p113 = por %p111, %p112
      %s114 = ssub.s32 %s29, %s36
      %p115 = scmp.eq.s32.totalorder %s114, 0
      %s117 = sadd.s32 %s116, 1
      %s118 = scalar_select %p115, %s116, %s117
      %p121 = pneg %p115
      %p122 = scmp.eq.s32.totalorder %s21, 1
      %p123 = por %p121, %p122
      %p124 = scmp.ne.s32.totalorder %s116, %s119
      %p125 = scmp.eq.s32.totalorder %s21, 0
      %p126 = por %p124, %p125
      %p127 = scmp.ne.s32.totalorder %s116, %s119
      %p128 = scmp.eq.s32.totalorder %s26, 1
      %p129 = por %p127, %p128
      %p130 = scmp.ne.s32.totalorder %s119, %s120
      %p131 = scmp.eq.s32.totalorder %s26, 0
      %p132 = por %p130, %p131
      %p133 = scmp.ne.s32.totalorder %s119, %s120
      %p134 = scmp.eq.s32.totalorder %s27, 1
      %p135 = por %p133, %p134
      %p137 = scmp.ne.s32.totalorder %s120, %s136
      %p138 = scmp.eq.s32.totalorder %s27, 0
      %p139 = por %p137, %p138
      %s140 = ssub.s32 %s29, %s36
      %p141 = scmp.eq.s32.totalorder %s140, 0
      %s143 = sadd.s32 %s142, 1
      %s144 = scalar_select %p141, %s142, %s143
      %p147 = pneg %p141
      %p148 = scmp.eq.s32.totalorder %s21, 1
      %p149 = por %p147, %p148
      %p150 = scmp.ne.s32.totalorder %s142, %s145
      %p151 = scmp.eq.s32.totalorder %s21, 0
      %p152 = por %p150, %p151
      %p153 = scmp.ne.s32.totalorder %s142, %s145
      %p154 = scmp.eq.s32.totalorder %s26, 1
      %p155 = por %p153, %p154
      %p156 = scmp.ne.s32.totalorder %s145, %s146
      %p157 = scmp.eq.s32.totalorder %s26, 0
      %p158 = por %p156, %p157
      %p159 = scmp.ne.s32.totalorder %s145, %s146
      %p160 = scmp.eq.s32.totalorder %s27, 1
      %p161 = por %p159, %p160
      %p163 = scmp.ne.s32.totalorder %s146, %s162
      %p164 = scmp.eq.s32.totalorder %s27, 0
      %p165 = por %p163, %p164
      %s166 = ssub.s32 %s29, %s36
      %p167 = scmp.eq.s32.totalorder %s166, 0
      %s169 = sadd.s32 %s168, 1
      %s170 = scalar_select %p167, %s168, %s169
      %p173 = pneg %p167
      %p174 = scmp.eq.s32.totalorder %s21, 1
      %p175 = por %p173, %p174
      %p176 = scmp.ne.s32.totalorder %s168, %s171
      %p177 = scmp.eq.s32.totalorder %s21, 0
      %p178 = por %p176, %p177
      %p179 = scmp.ne.s32.totalorder %s168, %s171
      %p180 = scmp.eq.s32.totalorder %s26, 1
      %p181 = por %p179, %p180
      %p182 = scmp.ne.s32.totalorder %s171, %s172
      %p183 = scmp.eq.s32.totalorder %s26, 0
      %p184 = por %p182, %p183
      %p185 = scmp.ne.s32.totalorder %s171, %s172
      %p186 = scmp.eq.s32.totalorder %s27, 1
      %p187 = por %p185, %p186
      %p189 = scmp.ne.s32.totalorder %s172, %s188
      %p190 = scmp.eq.s32.totalorder %s27, 0
      %p191 = por %p189, %p190
      %s192 = ssub.s32 %s29, %s36
      %p193 = scmp.eq.s32.totalorder %s192, 0
      %s195 = sadd.s32 %s194, 1
      %s196 = scalar_select %p193, %s194, %s195
      %p199 = pneg %p193
      %p200 = scmp.eq.s32.totalorder %s21, 1
      %p201 = por %p199, %p200
      %p202 = scmp.ne.s32.totalorder %s194, %s197
      %p203 = scmp.eq.s32.totalorder %s21, 0
      %p204 = por %p202, %p203
      %p205 = scmp.ne.s32.totalorder %s194, %s197
      %p206 = scmp.eq.s32.totalorder %s26, 1
      %p207 = por %p205, %p206
      %p208 = scmp.ne.s32.totalorder %s197, %s198
      %p209 = scmp.eq.s32.totalorder %s26, 0
      %p210 = por %p208, %p209
      %p211 = scmp.ne.s32.totalorder %s197, %s198
      %p212 = scmp.eq.s32.totalorder %s27, 1
      %p213 = por %p211, %p212
      %p215 = scmp.ne.s32.totalorder %s198, %s214
      %p216 = scmp.eq.s32.totalorder %s27, 0
      %p217 = por %p215, %p216
      %s218 = ssub.s32 %s29, %s36
      %p219 = scmp.eq.s32.totalorder %s218, 0
      %s221 = sadd.s32 %s220, 1
      %s222 = scalar_select %p219, %s220, %s221
      %p225 = pneg %p219
      %p226 = scmp.eq.s32.totalorder %s21, 1
      %p227 = por %p225, %p226
      %p228 = scmp.ne.s32.totalorder %s220, %s223
      %p229 = scmp.eq.s32.totalorder %s21, 0
      %p230 = por %p228, %p229
      %p231 = scmp.ne.s32.totalorder %s220, %s223
      %p232 = scmp.eq.s32.totalorder %s26, 1
      %p233 = por %p231, %p232
      %p234 = scmp.ne.s32.totalorder %s223, %s224
      %p235 = scmp.eq.s32.totalorder %s26, 0
      %p236 = por %p234, %p235
      %p237 = scmp.ne.s32.totalorder %s223, %s224
      %p238 = scmp.eq.s32.totalorder %s27, 1
      %p239 = por %p237, %p238
      %p241 = scmp.ne.s32.totalorder %s224, %s240
      %p242 = scmp.eq.s32.totalorder %s27, 0
      %p243 = por %p241, %p242
      %s244 = ssub.s32 %s29, %s36
      %p245 = scmp.eq.s32.totalorder %s244, 0
      %s247 = sadd.s32 %s246, 1
      %s248 = scalar_select %p245, %s246, %s247
      %p251 = pneg %p245
      %p252 = scmp.eq.s32.totalorder %s21, 1
      %p253 = por %p251, %p252
      %p254 = scmp.ne.s32.totalorder %s246, %s249
      %p255 = scmp.eq.s32.totalorder %s21, 0
      %p256 = por %p254, %p255
      %p257 = scmp.ne.s32.totalorder %s246, %s249
      %p258 = scmp.eq.s32.totalorder %s26, 1
      %p259 = por %p257, %p258
      %p260 = scmp.ne.s32.totalorder %s249, %s250
      %p261 = scmp.eq.s32.totalorder %s26, 0
      %p262 = por %p260, %p261
      %p263 = scmp.ne.s32.totalorder %s249, %s250
      %p264 = scmp.eq.s32.totalorder %s27, 1
      %p265 = por %p263, %p264
      %p267 = scmp.ne.s32.totalorder %s250, %s266
      %p268 = scmp.eq.s32.totalorder %s27, 0
      %p269 = por %p267, %p268
      %s270 = ssub.s32 %s29, %s36
      %p271 = scmp.eq.s32.totalorder %s270, 0
      %s273 = sadd.s32 %s272, 1
      %s274 = scalar_select %p271, %s272, %s273
      %p277 = pneg %p271
      %p278 = scmp.eq.s32.totalorder %s21, 1
      %p279 = por %p277, %p278
      %p280 = scmp.ne.s32.totalorder %s272, %s275
      %p281 = scmp.eq.s32.totalorder %s21, 0
      %p282 = por %p280, %p281
      %p283 = scmp.ne.s32.totalorder %s272, %s275
      %p284 = scmp.eq.s32.totalorder %s26, 1
      %p285 = por %p283, %p284
      %p286 = scmp.ne.s32.totalorder %s275, %s276
      %p287 = scmp.eq.s32.totalorder %s26, 0
      %p288 = por %p286, %p287
      %p289 = scmp.ne.s32.totalorder %s275, %s276
      %p290 = scmp.eq.s32.totalorder %s27, 1
      %p291 = por %p289, %p290
      %p293 = scmp.ne.s32.totalorder %s276, %s292
      %p294 = scmp.eq.s32.totalorder %s27, 0
      %p295 = por %p293, %p294
      %s296 = ssub.s32 %s29, %s36
      %p297 = scmp.eq.s32.totalorder %s296, 0
      %s299 = sadd.s32 %s298, 1
      %s300 = scalar_select %p297, %s298, %s299
      %p303 = pneg %p297
      %p304 = scmp.eq.s32.totalorder %s21, 1
      %p305 = por %p303, %p304
      %p306 = scmp.ne.s32.totalorder %s298, %s301
      %p307 = scmp.eq.s32.totalorder %s21, 0
      %p308 = por %p306, %p307
      %p309 = scmp.ne.s32.totalorder %s298, %s301
      %p310 = scmp.eq.s32.totalorder %s26, 1
      %p311 = por %p309, %p310
      %p312 = scmp.ne.s32.totalorder %s301, %s302
      %p313 = scmp.eq.s32.totalorder %s26, 0
      %p314 = por %p312, %p313
      %p315 = scmp.ne.s32.totalorder %s301, %s302
      %p316 = scmp.eq.s32.totalorder %s27, 1
      %p317 = por %p315, %p316
      %p319 = scmp.ne.s32.totalorder %s302, %s318
      %p320 = scmp.eq.s32.totalorder %s27, 0
      %p321 = por %p319, %p320
      %s322 = ssub.s32 %s29, %s36
      %p323 = scmp.eq.s32.totalorder %s322, 0
      %s325 = sadd.s32 %s324, 1
      %s326 = scalar_select %p323, %s324, %s325
      %p329 = pneg %p323
      %p330 = scmp.eq.s32.totalorder %s21, 1
      %p331 = por %p329, %p330
      %p332 = scmp.ne.s32.totalorder %s324, %s327
      %p333 = scmp.eq.s32.totalorder %s21, 0
      %p334 = por %p332, %p333
      %p335 = scmp.ne.s32.totalorder %s324, %s327
      %p336 = scmp.eq.s32.totalorder %s26, 1
      %p337 = por %p335, %p336
      %p338 = scmp.ne.s32.totalorder %s327, %s328
      %p339 = scmp.eq.s32.totalorder %s26, 0
      %p340 = por %p338, %p339
      %p341 = scmp.ne.s32.totalorder %s327, %s328
      %p342 = scmp.eq.s32.totalorder %s27, 1
      %p343 = por %p341, %p342
      %p345 = scmp.ne.s32.totalorder %s328, %s344
      %p346 = scmp.eq.s32.totalorder %s27, 0
      %p347 = por %p345, %p346
      %s348 = ssub.s32 %s29, %s36
      %p349 = scmp.eq.s32.totalorder %s348, 0
      %s351 = sadd.s32 %s350, 1
      %s352 = scalar_select %p349, %s350, %s351
      %p355 = pneg %p349
      %p356 = scmp.eq.s32.totalorder %s21, 1
      %p357 = por %p355, %p356
      %p358 = scmp.ne.s32.totalorder %s350, %s353
      %p359 = scmp.eq.s32.totalorder %s21, 0
      %p360 = por %p358, %p359
      %p361 = scmp.ne.s32.totalorder %s350, %s353
      %p362 = scmp.eq.s32.totalorder %s26, 1
      %p363 = por %p361, %p362
      %p364 = scmp.ne.s32.totalorder %s353, %s354
      %p365 = scmp.eq.s32.totalorder %s26, 0
      %p366 = por %p364, %p365
      %p367 = scmp.ne.s32.totalorder %s353, %s354
      %p368 = scmp.eq.s32.totalorder %s27, 1
      %p369 = por %p367, %p368
      %p371 = scmp.ne.s32.totalorder %s354, %s370
      %p372 = scmp.eq.s32.totalorder %s27, 0
      %p373 = por %p371, %p372
      %s374 = ssub.s32 %s29, %s36
      %p375 = scmp.eq.s32.totalorder %s374, 0
      %s377 = sadd.s32 %s376, 1
      %s378 = scalar_select %p375, %s376, %s377
      %p381 = pneg %p375
      %p382 = scmp.eq.s32.totalorder %s21, 1
      %p383 = por %p381, %p382
      %p384 = scmp.ne.s32.totalorder %s376, %s379
      %p385 = scmp.eq.s32.totalorder %s21, 0
      %p386 = por %p384, %p385
      %p387 = scmp.ne.s32.totalorder %s376, %s379
      %p388 = scmp.eq.s32.totalorder %s26, 1
      %p389 = por %p387, %p388
      %p390 = scmp.ne.s32.totalorder %s379, %s380
      %p391 = scmp.eq.s32.totalorder %s26, 0
      %p392 = por %p390, %p391
      %p393 = scmp.ne.s32.totalorder %s379, %s380
      %p394 = scmp.eq.s32.totalorder %s27, 1
      %p395 = por %p393, %p394
      %p397 = scmp.ne.s32.totalorder %s380, %s396
      %p398 = scmp.eq.s32.totalorder %s27, 0
      %p399 = por %p397, %p398
      %s400 = ssub.s32 %s28, %s40
      %p401 = scmp.eq.s32.totalorder %s400, 0
      %s403 = sadd.s32 %s402, 1
      %s404 = scalar_select %p401, %s402, %s403
      %p407 = pneg %p401
      %p408 = scmp.eq.s32.totalorder %s21, 1
      %p409 = por %p407, %p408
      %p410 = scmp.ne.s32.totalorder %s402, %s405
      %p411 = scmp.eq.s32.totalorder %s21, 0
      %p412 = por %p410, %p411
      %p413 = scmp.ne.s32.totalorder %s402, %s405
      %p414 = scmp.eq.s32.totalorder %s26, 1
      %p415 = por %p413, %p414
      %p416 = scmp.ne.s32.totalorder %s405, %s406
      %p417 = scmp.eq.s32.totalorder %s26, 0
      %p418 = por %p416, %p417
      %p419 = scmp.ne.s32.totalorder %s405, %s406
      %p420 = scmp.eq.s32.totalorder %s27, 1
      %p421 = por %p419, %p420
      %p423 = scmp.ne.s32.totalorder %s406, %s422
      %p424 = scmp.eq.s32.totalorder %s27, 0
      %p425 = por %p423, %p424
      %p426 = scmp.le.s32.totalorder 1, %s21
      %p427 = scmp.lt.s32.totalorder %s21, 3
      %p428 = pnand %p426, %p427
      %p429 = pneg %p428
      // Predicated region
      $region9: #{tpu_custom_call.1} parent=5 // pred_check
        _
      $region10: #{tpu_custom_call.1} parent=5 // pred_check_branch
        %431 = sbr.rel (%p428) target = $region12
      $region11: #{tpu_custom_call.1} parent=5 // pred_region
        %s432 = ssub.s32 %s21, 1
        // Predicated region
        $region13: #{tpu_custom_call.1} parent=11 // pred_check
          %p433 = pneg %p59
        $region14: #{tpu_custom_call.1} parent=11 // pred_check_branch
          %435 = sbr.rel (%p433) target = $region16
        $region15: #{tpu_custom_call.1} parent=11 // pred_region
          %s436 = smul.u32 2, %s30
          %p437 = scmp.lt.s32.totalorder %s436, 1
          %s438 = scalar_select %p437, %s436, 1
          %s439 = smul.addr %s438, 8
          %s440 = scalar_lea.vmem %s0, %s439
          %s441 = smul.u32 2, %s30
        $region16: #{tpu_custom_call.1} parent=11 // pred_fallthru
          _
        // Predicated region
        $region17: #{tpu_custom_call.1} parent=11 // pred_check
          %p442 = pneg %p80
        $region18: #{tpu_custom_call.1} parent=11 // pred_check_branch
          %444 = sbr.rel (%p442) target = $region20
        $region19: #{tpu_custom_call.1} parent=11 // pred_region
          _
        $region20: #{tpu_custom_call.1} parent=11 // pred_fallthru
          _
      $region12: #{tpu_custom_call.1} parent=5 // pred_fallthru
        _
      %p445 = scmp.lt.s32.totalorder %s21, 2
      // Predicated region
      $region21: #{tpu_custom_call.1} parent=5 // pred_check
        %p446 = pneg %p445
      $region22: #{tpu_custom_call.1} parent=5 // pred_check_branch
        %448 = sbr.rel (%p446) target = $region24
      $region23: #{tpu_custom_call.1} parent=5 // pred_region
        // Predicated region
        $region25: #{tpu_custom_call.1} parent=23 // pred_check
          %p449 = pneg %p100
        $region26: #{tpu_custom_call.1} parent=23 // pred_check_branch
          %451 = sbr.rel (%p449) target = $region28
        $region27: #{tpu_custom_call.1} parent=23 // pred_region
          %p452 = scmp.lt.s32.totalorder %s29, 1
          %s453 = scalar_select %p452, %s29, 1
          %s454 = scalar_lea.vmem %s2, %s453
        $region28: #{tpu_custom_call.1} parent=23 // pred_fallthru
          _
        // Predicated region
        $region29: #{tpu_custom_call.1} parent=23 // pred_check
          %p455 = pneg %p126
        $region30: #{tpu_custom_call.1} parent=23 // pred_check_branch
          %457 = sbr.rel (%p455) target = $region32
        $region31: #{tpu_custom_call.1} parent=23 // pred_region
          %p458 = scmp.lt.s32.totalorder %s29, 1
          %s459 = scalar_select %p458, %s29, 1
          %s460 = scalar_lea.vmem %s3, %s459
        $region32: #{tpu_custom_call.1} parent=23 // pred_fallthru
          _
        // Predicated region
        $region33: #{tpu_custom_call.1} parent=23 // pred_check
          %p461 = pneg %p152
        $region34: #{tpu_custom_call.1} parent=23 // pred_check_branch
          %463 = sbr.rel (%p461) target = $region36
        $region35: #{tpu_custom_call.1} parent=23 // pred_region
          %p464 = scmp.lt.s32.totalorder %s29, 1
          %s465 = scalar_select %p464, %s29, 1
          %s466 = smul.addr %s465, 4
          %s467 = smul.addr %s466, 4
          %s468 = scalar_lea.vmem %s4, %s467
        $region36: #{tpu_custom_call.1} parent=23 // pred_fallthru
          _
        // Predicated region
        $region37: #{tpu_custom_call.1} parent=23 // pred_check
          %p469 = pneg %p178
        $region38: #{tpu_custom_call.1} parent=23 // pred_check_branch
          %471 = sbr.rel (%p469) target = $region40
        $region39: #{tpu_custom_call.1} parent=23 // pred_region
          %p472 = scmp.lt.s32.totalorder %s29, 1
          %s473 = scalar_select %p472, %s29, 1
          %s474 = scalar_lea.vmem %s5, %s473
        $region40: #{tpu_custom_call.1} parent=23 // pred_fallthru
          _
        // Predicated region
        $region41: #{tpu_custom_call.1} parent=23 // pred_check
          %p475 = pneg %p204
        $region42: #{tpu_custom_call.1} parent=23 // pred_check_branch
          %477 = sbr.rel (%p475) target = $region44
        $region43: #{tpu_custom_call.1} parent=23 // pred_region
          %p478 = scmp.lt.s32.totalorder %s29, 1
          %s479 = scalar_select %p478, %s29, 1
          %s480 = smul.addr %s479, 4
          %s481 = smul.addr %s480, 4
          %s482 = scalar_lea.vmem %s6, %s481
        $region44: #{tpu_custom_call.1} parent=23 // pred_fallthru
          _
        // Predicated region
        $region45: #{tpu_custom_call.1} parent=23 // pred_check
          %p483 = pneg %p230
        $region46: #{tpu_custom_call.1} parent=23 // pred_check_branch
          %485 = sbr.rel (%p483) target = $region48
        $region47: #{tpu_custom_call.1} parent=23 // pred_region
          %p486 = scmp.lt.s32.totalorder %s29, 1
          %s487 = scalar_select %p486, %s29, 1
          %s488 = scalar_lea.vmem %s7, %s487
        $region48: #{tpu_custom_call.1} parent=23 // pred_fallthru
          _
        // Predicated region
        $region49: #{tpu_custom_call.1} parent=23 // pred_check
          %p489 = pneg %p256
        $region50: #{tpu_custom_call.1} parent=23 // pred_check_branch
          %491 = sbr.rel (%p489) target = $region52
        $region51: #{tpu_custom_call.1} parent=23 // pred_region
          %p492 = scmp.lt.s32.totalorder %s29, 1
          %s493 = scalar_select %p492, %s29, 1
          %s494 = scalar_lea.vmem %s8, %s493
        $region52: #{tpu_custom_call.1} parent=23 // pred_fallthru
          _
        // Predicated region
        $region53: #{tpu_custom_call.1} parent=23 // pred_check
          %p495 = pneg %p282
        $region54: #{tpu_custom_call.1} parent=23 // pred_check_branch
          %497 = sbr.rel (%p495) target = $region56
        $region55: #{tpu_custom_call.1} parent=23 // pred_region
          %p498 = scmp.lt.s32.totalorder %s29, 1
          %s499 = scalar_select %p498, %s29, 1
          %s500 = scalar_lea.vmem %s9, %s499
        $region56: #{tpu_custom_call.1} parent=23 // pred_fallthru
          _
        // Predicated region
        $region57: #{tpu_custom_call.1} parent=23 // pred_check
          %p501 = pneg %p308
        $region58: #{tpu_custom_call.1} parent=23 // pred_check_branch
          %503 = sbr.rel (%p501) target = $region60
        $region59: #{tpu_custom_call.1} parent=23 // pred_region
          %p504 = scmp.lt.s32.totalorder %s29, 1
          %s505 = scalar_select %p504, %s29, 1
          %s506 = smul.addr %s505, 4
          %s507 = smul.addr %s506, 4
          %s508 = scalar_lea.vmem %s10, %s507
        $region60: #{tpu_custom_call.1} parent=23 // pred_fallthru
          _
        // Predicated region
        $region61: #{tpu_custom_call.1} parent=23 // pred_check
          %p509 = pneg %p334
        $region62: #{tpu_custom_call.1} parent=23 // pred_check_branch
          %511 = sbr.rel (%p509) target = $region64
        $region63: #{tpu_custom_call.1} parent=23 // pred_region
          %p512 = scmp.lt.s32.totalorder %s29, 1
          %s513 = scalar_select %p512, %s29, 1
          %s514 = scalar_lea.vmem %s11, %s513
        $region64: #{tpu_custom_call.1} parent=23 // pred_fallthru
          _
        // Predicated region
        $region65: #{tpu_custom_call.1} parent=23 // pred_check
          %p515 = pneg %p360
        $region66: #{tpu_custom_call.1} parent=23 // pred_check_branch
          %517 = sbr.rel (%p515) target = $region68
        $region67: #{tpu_custom_call.1} parent=23 // pred_region
          %p518 = scmp.lt.s32.totalorder %s29, 1
          %s519 = scalar_select %p518, %s29, 1
          %s520 = smul.addr %s519, 16
          %s521 = smul.addr %s520, 4
          %s522 = scalar_lea.vmem %s12, %s521
        $region68: #{tpu_custom_call.1} parent=23 // pred_fallthru
          _
        // Predicated region
        $region69: #{tpu_custom_call.1} parent=23 // pred_check
          %p523 = pneg %p386
        $region70: #{tpu_custom_call.1} parent=23 // pred_check_branch
          %525 = sbr.rel (%p523) target = $region72
        $region71: #{tpu_custom_call.1} parent=23 // pred_region
          %p526 = scmp.lt.s32.totalorder %s29, 1
          %s527 = scalar_select %p526, %s29, 1
          %s528 = scalar_lea.vmem %s13, %s527
        $region72: #{tpu_custom_call.1} parent=23 // pred_fallthru
          _
      $region24: #{tpu_custom_call.1} parent=5 // pred_fallthru
        _
      %p529 = scmp.le.s32.totalorder 1, %s21
      %p530 = scmp.lt.s32.totalorder %s21, 3
      %p531 = pnand %p529, %p530
      %p532 = pneg %p531
      // Predicated region
      $region73: #{tpu_custom_call.1} parent=5 // pred_check
        _
      $region74: #{tpu_custom_call.1} parent=5 // pred_check_branch
        %534 = sbr.rel (%p531) target = $region76
      $region75: #{tpu_custom_call.1} parent=5 // pred_region
        %s535 = ssub.s32 %s21, 1
        %s536 = smul.u32 2, %s30
        %p537 = scmp.lt.s32.totalorder %s536, 1
        %s538 = scalar_select %p537, %s536, 1
        %s539 = smul.addr %s538, 8
        %s540 = scalar_lea.vmem %s0, %s539
        %p541 = pneg %p59
        %p542 = pneg %p56
        %p543 = pneg %p80
        %p544 = pneg %p77
        %p545 = scmp.lt.s32.totalorder %s31, 1
        %s546 = scalar_select %p545, %s31, 1
        %s547 = scalar_lea.vmem %s2, %s546
        %p548 = pneg %p106
        %p549 = pneg %p103
        %p550 = scmp.lt.s32.totalorder %s31, 1
        %s551 = scalar_select %p550, %s31, 1
        %s552 = scalar_lea.vmem %s3, %s551
        %p553 = pneg %p132
        %p554 = pneg %p129
        %p555 = scmp.lt.s32.totalorder %s31, 1
        %s556 = scalar_select %p555, %s31, 1
        %s557 = smul.addr %s556, 4
        %s558 = smul.addr %s557, 4
        %s559 = scalar_lea.vmem %s4, %s558
        %p560 = pneg %p158
        %p561 = pneg %p155
        %p562 = scmp.lt.s32.totalorder %s31, 1
        %s563 = scalar_select %p562, %s31, 1
        %s564 = scalar_lea.vmem %s5, %s563
        %p565 = pneg %p184
        %p566 = pneg %p181
        %p567 = scmp.lt.s32.totalorder %s31, 1
        %s568 = scalar_select %p567, %s31, 1
        %s569 = smul.addr %s568, 4
        %s570 = smul.addr %s569, 4
        %s571 = scalar_lea.vmem %s6, %s570
        %p572 = pneg %p210
        %p573 = pneg %p207
        %p574 = scmp.lt.s32.totalorder %s31, 1
        %s575 = scalar_select %p574, %s31, 1
        %s576 = scalar_lea.vmem %s7, %s575
        %p577 = pneg %p236
        %p578 = pneg %p233
        %p579 = scmp.lt.s32.totalorder %s31, 1
        %s580 = scalar_select %p579, %s31, 1
        %s581 = scalar_lea.vmem %s8, %s580
        %p582 = pneg %p262
        %p583 = pneg %p259
        %p584 = scmp.lt.s32.totalorder %s31, 1
        %s585 = scalar_select %p584, %s31, 1
        %s586 = scalar_lea.vmem %s9, %s585
        %p587 = pneg %p288
        %p588 = pneg %p285
        %p589 = scmp.lt.s32.totalorder %s31, 1
        %s590 = scalar_select %p589, %s31, 1
        %s591 = smul.addr %s590, 4
        %s592 = smul.addr %s591, 4
        %s593 = scalar_lea.vmem %s10, %s592
        %p594 = pneg %p314
        %p595 = pneg %p311
        %p596 = scmp.lt.s32.totalorder %s31, 1
        %s597 = scalar_select %p596, %s31, 1
        %s598 = scalar_lea.vmem %s11, %s597
        %p599 = pneg %p340
        %p600 = pneg %p337
        %p601 = scmp.lt.s32.totalorder %s31, 1
        %s602 = scalar_select %p601, %s31, 1
        %s603 = smul.addr %s602, 16
        %s604 = smul.addr %s603, 4
        %s605 = scalar_lea.vmem %s12, %s604
        %p606 = pneg %p366
        %p607 = pneg %p363
        %p608 = scmp.lt.s32.totalorder %s31, 1
        %s609 = scalar_select %p608, %s31, 1
        %s610 = scalar_lea.vmem %s13, %s609
        %p611 = pneg %p392
        %p612 = pneg %p389
        %p613 = pneg %p418
        %p614 = pneg %p415
        %s615 = smul.u32 2, %s30
        %p616 = scmp.lt.s32.totalorder %s615, 1
        %s617 = scalar_select %p616, %s615, 1
        %s618 = smul.addr %s617, 8
        %s619 = scalar_lea.vmem %s0, %s618
        %s620 = smul.u32 2, %s30
        %p621 = scmp.lt.s32.totalorder %s31, 1
        %s622 = scalar_select %p621, %s31, 1
        %s623 = scalar_lea.vmem %s2, %s622
        %p624 = scmp.lt.s32.totalorder %s31, 1
        %s625 = scalar_select %p624, %s31, 1
        %s626 = scalar_lea.vmem %s3, %s625
        %p627 = scmp.lt.s32.totalorder %s31, 1
        %s628 = scalar_select %p627, %s31, 1
        %s629 = smul.addr %s628, 4
        %s630 = smul.addr %s629, 4
        %s631 = scalar_lea.vmem %s4, %s630
        %p632 = scmp.lt.s32.totalorder %s31, 1
        %s633 = scalar_select %p632, %s31, 1
        %s634 = scalar_lea.vmem %s5, %s633
        %p635 = scmp.lt.s32.totalorder %s31, 1
        %s636 = scalar_select %p635, %s31, 1
        %s637 = smul.addr %s636, 4
        %s638 = smul.addr %s637, 4
        %s639 = scalar_lea.vmem %s6, %s638
        %p640 = scmp.lt.s32.totalorder %s31, 1
        %s641 = scalar_select %p640, %s31, 1
        %s642 = scalar_lea.vmem %s7, %s641
        %p643 = scmp.lt.s32.totalorder %s31, 1
        %s644 = scalar_select %p643, %s31, 1
        %s645 = scalar_lea.vmem %s8, %s644
        %p646 = scmp.lt.s32.totalorder %s31, 1
        %s647 = scalar_select %p646, %s31, 1
        %s648 = scalar_lea.vmem %s9, %s647
        %p649 = scmp.lt.s32.totalorder %s31, 1
        %s650 = scalar_select %p649, %s31, 1
        %s651 = smul.addr %s650, 4
        %s652 = smul.addr %s651, 4
        %s653 = scalar_lea.vmem %s10, %s652
        %p654 = scmp.lt.s32.totalorder %s31, 1
        %s655 = scalar_select %p654, %s31, 1
        %s656 = scalar_lea.vmem %s11, %s655
        %p657 = scmp.lt.s32.totalorder %s31, 1
        %s658 = scalar_select %p657, %s31, 1
        %s659 = smul.addr %s658, 16
        %s660 = smul.addr %s659, 4
        %s661 = scalar_lea.vmem %s12, %s660
        %p662 = scmp.lt.s32.totalorder %s31, 1
        %s663 = scalar_select %p662, %s31, 1
        %s664 = scalar_lea.vmem %s13, %s663
        %s665 = smul.u32 2, %s30
        %p667 = scmp.eq.s32.totalorder %s31, 0
        // Predicated region
        $region77: #{tpu_custom_call.1} parent=75 // pred_check
          %p668 = pneg %p667
        $region78: #{tpu_custom_call.1} parent=75 // pred_check_branch
          %670 = sbr.rel (%p668) target = $region80
        $region79: #{tpu_custom_call.1} parent=75 // pred_region
          %v671 = vld [vmem:[%s619] sm:$0xff]
          %v672 = vld [vmem:[%s619 + $0x8] sm:$0xff]
          %v673 = vld [vmem:[%s1] sm:$0xff]
          %v674 = vadd.f32 %v671, %v673
          %v675 = vadd.f32 %v672, %v673
          %vm676 = vcmask 261120
          %677 = vst.msk [vmem:[#allocation2] sm:$0xff] %vm676, %v674
          %678 = vst.msk [vmem:[#allocation2 + $0x8] sm:$0xff] %vm676, %v675
        $region80: #{tpu_custom_call.1} parent=75 // pred_fallthru
          _
        %v679 = vld [vmem:[#allocation2] sm:$0xff]
        %v680 = vld [vmem:[#allocation2 + $0x8] sm:$0xff]
        %v681 = vld [vmem:[%s623] sm:$0x1]
        %v682 = vld [vmem:[%s626] sm:$0x1]
        %vm683 = vcmask 261120
        %v684 = vsel %vm683, %v679, 0.0
        %685 = vadd.xlane.f32.xlu0 %v684
        %v686 = vpop.xlane.xlu0 %685
        %v687 = vsel %vm683, %v680, 0.0
        %688 = vadd.xlane.f32.xlu0 %v687
        %v689 = vpop.xlane.xlu0 %688
        %v690 = vrcp.pop 32.0
        %v691 = vmul.f32 %v686, %v690
        %v692 = vmul.f32 %v689, %v690
        %v693 = vsub.f32 %v679, %v691
        %v694 = vsub.f32 %v680, %v692
        %v695 = vmul.f32 %v693, %v693
        %v696 = vmul.f32 %v694, %v694
        %v697 = vsel %vm683, %v695, 0.0
        %698 = vadd.xlane.f32.xlu0 %v697
        %v699 = vpop.xlane.xlu0 %698
        %v700 = vsel %vm683, %v696, 0.0
        %701 = vadd.xlane.f32.xlu0 %v700
        %v702 = vpop.xlane.xlu0 %701
        %v703 = vmul.f32 %v699, %v690
        %v704 = vmul.f32 %v702, %v690
        %v705 = vadd.f32 %v703, 1e-05
        %v706 = vadd.f32 %v704, 1e-05
        %v707 = vrsqrt.pop %v705
        %v708 = vrsqrt.pop %v706
        %v709 = vmul.f32 %v693, %v707
        %v710 = vmul.f32 %v694, %v708
        %v712 = vlaneseq
        %v713 = vshrl.u32 %v712, 7
        %v714 = vsub.s32 0, %v713
        %v715 = vrot.slane %v681, %v714
        %v717 = vmul.f32 %v709, %v715
        %v718 = vmul.f32 %v710, %v715
        %v720 = vlaneseq
        %v721 = vshrl.u32 %v720, 7
        %v722 = vsub.s32 0, %v721
        %v723 = vrot.slane %v682, %v722
        %v725 = vadd.f32 %v717, %v723
        %v726 = vadd.f32 %v718, %v723
        %v727 = vpack.c.bf16 %v726, %v725
        %v728 = vld [vmem:[%s631] sm:$0xf]
        %v729 = vld [vmem:[%s631 + $0x4] sm:$0xf]
        %v730 = vld [vmem:[%s631 + $0x8] sm:$0xf]
        %v731 = vld [vmem:[%s631 + $0xc] sm:$0xf]
        %v732 = vld [vmem:[%s634] sm:$0x1]
        %v734 = vlaneseq
        %v735 = vshrl.u32 %v734, 7
        %v736 = vsub.s32 0, %v735
        %v737 = vrot.slane %v732, %v736
        %v743 = vunpack.c.l.b16 %v728
        %v744 = vunpack.c.l.b16 %v729
        %v745 = vunpack.c.l.b16 %v730
        %v746 = vunpack.c.l.b16 %v731
        %v747 = vpack.c.b16 %v744, %v743
        %v748 = vpack.c.b16 %v746, %v745
        %v752 = vsel %vm683, %v727, 0
        %754 = vmatprep.subr.bf16.mxu0 0
        %755 = vmatpush1.bf16.msra.mxu0 0
        %756 = vmatprep.subr.bf16.mxu0 0
        %757 = vmatpush1.bf16.msra.mxu0 0
        %758 = vmatprep.subr.bf16.mxu0 0
        %759 = vmatpush1.bf16.msra.mxu0 0
        %760 = vmatprep.subr.bf16.mxu0 0
        %761 = vmatpush1.bf16.msra.mxu0 0
        %762 = vmatprep.subr.bf16.mxu0 0
        %763 = vmatpush1.bf16.msra.mxu0 0
        %764 = vmatprep.subr.bf16.mxu0 0
        %765 = vmatpush1.bf16.msra.mxu0 0
        %766 = vmatprep.subr.bf16.mxu0 0
        %767 = vmatpush1.bf16.msra.mxu0 %v748
        %768 = vmatprep.subr.bf16.mxu0 0
        %769 = vmatpush1.bf16.msra.mxu0 %v747
        %770 = vmatprep.subr.bf16.mxu0 0
        %771 = vmatpush2.bf16.msra.mxu0 0
        %772 = vmatprep.subr.bf16.mxu0 0
        %773 = vmatpush2.bf16.msra.mxu0 0
        %774 = vmatprep.subr.bf16.mxu0 0
        %775 = vmatpush2.bf16.msra.mxu0 0
        %776 = vmatprep.subr.bf16.mxu0 0
        %777 = vmatpush2.bf16.msra.mxu0 0
        %778 = vmatprep.subr.bf16.mxu0 0
        %779 = vmatpush2.bf16.msra.mxu0 0
        %780 = vmatprep.subr.bf16.mxu0 0
        %781 = vmatpush2.bf16.msra.mxu0 0
        %782 = vmatprep.subr.bf16.mxu0 0
        %783 = vmatpush2.bf16.msra.mxu0 0
        %784 = vmatprep.subr.bf16.mxu0 0
        %785 = vmatpush2.bf16.msra.mxu0 0
        %786 = vmatprep.mubr.bf16.mxu0 0
        %787 = vmatmul.mubr.bf16.gmra.mxu0 %v752
        %v788 = vpop.f32.mrf.mxu0
        %v789 = vadd.f32 %v737, %v788
        %v790 = vpop.f32.mrf.mxu0
        %v791 = vpop.f32.mrf.mxu0
        %v792 = vadd.f32 %v737, %v791
        %v793 = vpop.f32.mrf.mxu0
        %794 = vdwg.mxu0
        %v795 = vlaneseq
        %v796 = vshrl.u32 %v795, 7
        %v797 = vlaneseq
        %v798 = vand.u32 %v797, 127
        %vm799 = vcmp.le.s32.totalorder %v798, %v796
        %v800 = vsel %vm799, 0.0, -1e+30
        %v801 = vld [vmem:[%s639] sm:$0xf]
        %v802 = vld [vmem:[%s639 + $0x4] sm:$0xf]
        %v803 = vld [vmem:[%s639 + $0x8] sm:$0xf]
        %v804 = vld [vmem:[%s639 + $0xc] sm:$0xf]
        %806 = vrot.lane.b32.xlu0 %v789, 120
        %v807 = vpop.permute.xlu0 %806
        %809 = vrot.lane.b32.xlu0 %v789, 112
        %v810 = vpop.permute.xlu0 %809
        %812 = vrot.lane.b32.xlu0 %v789, 104
        %v813 = vpop.permute.xlu0 %812
        %v815 = vpack.c.bf16 %v789, %v789
        %v816 = vpack.c.bf16 %v807, %v807
        %v817 = vpack.c.bf16 %v810, %v810
        %v818 = vpack.c.bf16 %v813, %v813
        %820 = vrot.lane.b32.xlu0 %v815, 96
        %v821 = vpop.permute.xlu0 %820
        %vm822 = vcmask 64512
        %v824 = vsel %vm822, %v815, 0
        %v827 = vsel %vm822, %v821, 0
        %829 = vmatprep.subr.bf16.mxu0 0
        %830 = vmatpush1.bf16.xpose.msra.mxu0 0
        %831 = vmatprep.subr.bf16.mxu0 0
        %832 = vmatpush1.bf16.xpose.msra.mxu0 0
        %833 = vmatprep.subr.bf16.mxu0 0
        %834 = vmatpush1.bf16.xpose.msra.mxu0 0
        %835 = vmatprep.subr.bf16.mxu0 0
        %836 = vmatpush1.bf16.xpose.msra.mxu0 0
        %837 = vmatprep.subr.bf16.mxu0 0
        %838 = vmatpush1.bf16.xpose.msra.mxu0 0
        %839 = vmatprep.subr.bf16.mxu0 0
        %840 = vmatpush1.bf16.xpose.msra.mxu0 0
        %841 = vmatprep.subr.bf16.mxu0 0
        %842 = vmatpush1.bf16.xpose.msra.mxu0 0
        %843 = vmatprep.subr.bf16.mxu0 0
        %844 = vmatpush1.bf16.xpose.msra.mxu0 %v827
        %845 = vmatprep.subr.bf16.mxu0 0
        %846 = vmatpush2.bf16.xpose.msra.mxu0 0
        %847 = vmatprep.subr.bf16.mxu0 0
        %848 = vmatpush2.bf16.xpose.msra.mxu0 0
        %849 = vmatprep.subr.bf16.mxu0 0
        %850 = vmatpush2.bf16.xpose.msra.mxu0 0
        %851 = vmatprep.subr.bf16.mxu0 0
        %852 = vmatpush2.bf16.xpose.msra.mxu0 0
        %853 = vmatprep.subr.bf16.mxu0 0
        %854 = vmatpush2.bf16.xpose.msra.mxu0 0
        %855 = vmatprep.subr.bf16.mxu0 0
        %856 = vmatpush2.bf16.xpose.msra.mxu0 0
        %857 = vmatprep.subr.bf16.mxu0 0
        %858 = vmatpush2.bf16.xpose.msra.mxu0 0
        %859 = vmatprep.subr.bf16.mxu0 0
        %860 = vmatpush2.bf16.xpose.msra.mxu0 0
        %861 = vmatprep.mubr.bf16.mxu0 0
        %862 = vmatmul.mubr.bf16.gmra.mxu0 %v824
        %v863 = vpop.f32.mrf.mxu0
        %v864 = vadd.f32 %v800, %v863
        %v865 = vpop.f32.mrf.mxu0
        %v866 = vpop.f32.mrf.mxu0
        %v867 = vpop.f32.mrf.mxu0
        %868 = vdwg.mxu0
        %870 = vrot.lane.b32.xlu0 %v816, 96
        %v871 = vpop.permute.xlu0 %870
        %v873 = vsel %vm822, %v816, 0
        %v876 = vsel %vm822, %v871, 0
        %878 = vmatprep.subr.bf16.mxu0 0
        %879 = vmatpush1.bf16.xpose.msra.mxu0 0
        %880 = vmatprep.subr.bf16.mxu0 0
        %881 = vmatpush1.bf16.xpose.msra.mxu0 0
        %882 = vmatprep.subr.bf16.mxu0 0
        %883 = vmatpush1.bf16.xpose.msra.mxu0 0
        %884 = vmatprep.subr.bf16.mxu0 0
        %885 = vmatpush1.bf16.xpose.msra.mxu0 0
        %886 = vmatprep.subr.bf16.mxu0 0
        %887 = vmatpush1.bf16.xpose.msra.mxu0 0
        %888 = vmatprep.subr.bf16.mxu0 0
        %889 = vmatpush1.bf16.xpose.msra.mxu0 0
        %890 = vmatprep.subr.bf16.mxu0 0
        %891 = vmatpush1.bf16.xpose.msra.mxu0 0
        %892 = vmatprep.subr.bf16.mxu0 0
        %893 = vmatpush1.bf16.xpose.msra.mxu0 %v876
        %894 = vmatprep.subr.bf16.mxu0 0
        %895 = vmatpush2.bf16.xpose.msra.mxu0 0
        %896 = vmatprep.subr.bf16.mxu0 0
        %897 = vmatpush2.bf16.xpose.msra.mxu0 0
        %898 = vmatprep.subr.bf16.mxu0 0
        %899 = vmatpush2.bf16.xpose.msra.mxu0 0
        %900 = vmatprep.subr.bf16.mxu0 0
        %901 = vmatpush2.bf16.xpose.msra.mxu0 0
        %902 = vmatprep.subr.bf16.mxu0 0
        %903 = vmatpush2.bf16.xpose.msra.mxu0 0
        %904 = vmatprep.subr.bf16.mxu0 0
        %905 = vmatpush2.bf16.xpose.msra.mxu0 0
        %906 = vmatprep.subr.bf16.mxu0 0
        %907 = vmatpush2.bf16.xpose.msra.mxu0 0
        %908 = vmatprep.subr.bf16.mxu0 0
        %909 = vmatpush2.bf16.xpose.msra.mxu0 0
        %910 = vmatprep.mubr.bf16.mxu0 0
        %911 = vmatmul.mubr.bf16.gmra.mxu0 %v873
        %v912 = vpop.f32.mrf.mxu0
        %v913 = vadd.f32 %v800, %v912
        %v914 = vpop.f32.mrf.mxu0
        %v915 = vpop.f32.mrf.mxu0
        %v916 = vpop.f32.mrf.mxu0
        %917 = vdwg.mxu0
        %919 = vrot.lane.b32.xlu0 %v817, 96
        %v920 = vpop.permute.xlu0 %919
        %v922 = vsel %vm822, %v817, 0
        %v925 = vsel %vm822, %v920, 0
        %927 = vmatprep.subr.bf16.mxu0 0
        %928 = vmatpush1.bf16.xpose.msra.mxu0 0
        %929 = vmatprep.subr.bf16.mxu0 0
        %930 = vmatpush1.bf16.xpose.msra.mxu0 0
        %931 = vmatprep.subr.bf16.mxu0 0
        %932 = vmatpush1.bf16.xpose.msra.mxu0 0
        %933 = vmatprep.subr.bf16.mxu0 0
        %934 = vmatpush1.bf16.xpose.msra.mxu0 0
        %935 = vmatprep.subr.bf16.mxu0 0
        %936 = vmatpush1.bf16.xpose.msra.mxu0 0
        %937 = vmatprep.subr.bf16.mxu0 0
        %938 = vmatpush1.bf16.xpose.msra.mxu0 0
        %939 = vmatprep.subr.bf16.mxu0 0
        %940 = vmatpush1.bf16.xpose.msra.mxu0 0
        %941 = vmatprep.subr.bf16.mxu0 0
        %942 = vmatpush1.bf16.xpose.msra.mxu0 %v925
        %943 = vmatprep.subr.bf16.mxu0 0
        %944 = vmatpush2.bf16.xpose.msra.mxu0 0
        %945 = vmatprep.subr.bf16.mxu0 0
        %946 = vmatpush2.bf16.xpose.msra.mxu0 0
        %947 = vmatprep.subr.bf16.mxu0 0
        %948 = vmatpush2.bf16.xpose.msra.mxu0 0
        %949 = vmatprep.subr.bf16.mxu0 0
        %950 = vmatpush2.bf16.xpose.msra.mxu0 0
        %951 = vmatprep.subr.bf16.mxu0 0
        %952 = vmatpush2.bf16.xpose.msra.mxu0 0
        %953 = vmatprep.subr.bf16.mxu0 0
        %954 = vmatpush2.bf16.xpose.msra.mxu0 0
        %955 = vmatprep.subr.bf16.mxu0 0
        %956 = vmatpush2.bf16.xpose.msra.mxu0 0
        %957 = vmatprep.subr.bf16.mxu0 0
        %958 = vmatpush2.bf16.xpose.msra.mxu0 0
        %959 = vmatprep.mubr.bf16.mxu0 0
        %960 = vmatmul.mubr.bf16.gmra.mxu0 %v922
        %v961 = vpop.f32.mrf.mxu0
        %v962 = vadd.f32 %v800, %v961
        %v963 = vpop.f32.mrf.mxu0
        %v964 = vpop.f32.mrf.mxu0
        %v965 = vpop.f32.mrf.mxu0
        %966 = vdwg.mxu0
        %968 = vrot.lane.b32.xlu0 %v818, 96
        %v969 = vpop.permute.xlu0 %968
        %v971 = vsel %vm822, %v818, 0
        %v974 = vsel %vm822, %v969, 0
        %976 = vmatprep.subr.bf16.mxu0 0
        %977 = vmatpush1.bf16.xpose.msra.mxu0 0
        %978 = vmatprep.subr.bf16.mxu0 0
        %979 = vmatpush1.bf16.xpose.msra.mxu0 0
        %980 = vmatprep.subr.bf16.mxu0 0
        %981 = vmatpush1.bf16.xpose.msra.mxu0 0
        %982 = vmatprep.subr.bf16.mxu0 0
        %983 = vmatpush1.bf16.xpose.msra.mxu0 0
        %984 = vmatprep.subr.bf16.mxu0 0
        %985 = vmatpush1.bf16.xpose.msra.mxu0 0
        %986 = vmatprep.subr.bf16.mxu0 0
        %987 = vmatpush1.bf16.xpose.msra.mxu0 0
        %988 = vmatprep.subr.bf16.mxu0 0
        %989 = vmatpush1.bf16.xpose.msra.mxu0 0
        %990 = vmatprep.subr.bf16.mxu0 0
        %991 = vmatpush1.bf16.xpose.msra.mxu0 %v974
        %992 = vmatprep.subr.bf16.mxu0 0
        %993 = vmatpush2.bf16.xpose.msra.mxu0 0
        %994 = vmatprep.subr.bf16.mxu0 0
        %995 = vmatpush2.bf16.xpose.msra.mxu0 0
        %996 = vmatprep.subr.bf16.mxu0 0
        %997 = vmatpush2.bf16.xpose.msra.mxu0 0
        %998 = vmatprep.subr.bf16.mxu0 0
        %999 = vmatpush2.bf16.xpose.msra.mxu0 0
        %1000 = vmatprep.subr.bf16.mxu0 0
        %1001 = vmatpush2.bf16.xpose.msra.mxu0 0
        %1002 = vmatprep.subr.bf16.mxu0 0
        %1003 = vmatpush2.bf16.xpose.msra.mxu0 0
        %1004 = vmatprep.subr.bf16.mxu0 0
        %1005 = vmatpush2.bf16.xpose.msra.mxu0 0
        %1006 = vmatprep.subr.bf16.mxu0 0
        %1007 = vmatpush2.bf16.xpose.msra.mxu0 0
        %1008 = vmatprep.mubr.bf16.mxu0 0
        %1009 = vmatmul.mubr.bf16.gmra.mxu0 %v971
        %v1010 = vpop.f32.mrf.mxu0
        %v1011 = vadd.f32 %v800, %v1010
        %v1012 = vpop.f32.mrf.mxu0
        %v1013 = vpop.f32.mrf.mxu0
        %v1014 = vpop.f32.mrf.mxu0
        %1015 = vdwg.mxu0
        %v1016 = vsel %vm822, %v864, -inf
        %1017 = vmax.xlane.f32.xlu0 %v1016
        %v1018 = vpop.xlane.xlu0 %1017
        %v1019 = vsel %vm822, %v913, -inf
        %1020 = vmax.xlane.f32.xlu0 %v1019
        %v1021 = vpop.xlane.xlu0 %1020
        %v1022 = vsel %vm822, %v962, -inf
        %1023 = vmax.xlane.f32.xlu0 %v1022
        %v1024 = vpop.xlane.xlu0 %1023
        %v1025 = vsel %vm822, %v1011, -inf
        %1026 = vmax.xlane.f32.xlu0 %v1025
        %v1027 = vpop.xlane.xlu0 %1026
        %v1028 = vsub.f32 %v864, %v1018
        %v1029 = vsub.f32 %v913, %v1021
        %v1030 = vsub.f32 %v962, %v1024
        %v1031 = vsub.f32 %v1011, %v1027
        %v1032 = vmul.f32 %v1028, 1.442695
        %v1033 = vpow.pop %v1032
        %v1034 = vmul.f32 %v1029, 1.442695
        %v1035 = vpow.pop %v1034
        %v1036 = vmul.f32 %v1030, 1.442695
        %v1037 = vpow.pop %v1036
        %v1038 = vmul.f32 %v1031, 1.442695
        %v1039 = vpow.pop %v1038
        %v1040 = vsel %vm822, %v1033, 0.0
        %1041 = vadd.xlane.f32.xlu0 %v1040
        %v1042 = vpop.xlane.xlu0 %1041
        %v1043 = vsel %vm822, %v1035, 0.0
        %1044 = vadd.xlane.f32.xlu0 %v1043
        %v1045 = vpop.xlane.xlu0 %1044
        %v1046 = vsel %vm822, %v1037, 0.0
        %1047 = vadd.xlane.f32.xlu0 %v1046
        %v1048 = vpop.xlane.xlu0 %1047
        %v1049 = vsel %vm822, %v1039, 0.0
        %1050 = vadd.xlane.f32.xlu0 %v1049
        %v1051 = vpop.xlane.xlu0 %1050
        %v1052 = vrcp.pop %v1042
        %v1053 = vrcp.pop %v1045
        %v1054 = vrcp.pop %v1048
        %v1055 = vrcp.pop %v1051
        %v1056 = vmul.f32 %v1033, %v1052
        %v1057 = vmul.f32 %v1035, %v1053
        %v1058 = vmul.f32 %v1037, %v1054
        %v1059 = vmul.f32 %v1039, %v1055
        %v1060 = vpack.c.bf16 %v1056, %v1056
        %v1061 = vpack.c.bf16 %v1057, %v1057
        %v1062 = vpack.c.bf16 %v1058, %v1058
        %v1063 = vpack.c.bf16 %v1059, %v1059
        %1064 = vrot.lane.b32.xlu0 %v815, 64
        %v1065 = vpop.permute.xlu0 %1064
        %v1067 = vsel %vm822, %v1060, 0
        %vm1069 = vcmask 1043456
        %v1071 = vsel %vm1069, %v1065, 0
        %1073 = vmatprep.subr.bf16.mxu0 0
        %1074 = vmatpush1.bf16.msra.mxu0 0
        %1075 = vmatprep.subr.bf16.mxu0 0
        %1076 = vmatpush1.bf16.msra.mxu0 0
        %1077 = vmatprep.subr.bf16.mxu0 0
        %1078 = vmatpush1.bf16.msra.mxu0 0
        %1079 = vmatprep.subr.bf16.mxu0 0
        %1080 = vmatpush1.bf16.msra.mxu0 0
        %1081 = vmatprep.subr.bf16.mxu0 0
        %1082 = vmatpush1.bf16.msra.mxu0 0
        %1083 = vmatprep.subr.bf16.mxu0 0
        %1084 = vmatpush1.bf16.msra.mxu0 0
        %1085 = vmatprep.subr.bf16.mxu0 0
        %1086 = vmatpush1.bf16.msra.mxu0 0
        %1087 = vmatprep.subr.bf16.mxu0 0
        %1088 = vmatpush1.bf16.msra.mxu0 %v1071
        %1089 = vmatprep.subr.bf16.mxu0 0
        %1090 = vmatpush2.bf16.msra.mxu0 0
        %1091 = vmatprep.subr.bf16.mxu0 0
        %1092 = vmatpush2.bf16.msra.mxu0 0
        %1093 = vmatprep.subr.bf16.mxu0 0
        %1094 = vmatpush2.bf16.msra.mxu0 0
        %1095 = vmatprep.subr.bf16.mxu0 0
        %1096 = vmatpush2.bf16.msra.mxu0 0
        %1097 = vmatprep.subr.bf16.mxu0 0
        %1098 = vmatpush2.bf16.msra.mxu0 0
        %1099 = vmatprep.subr.bf16.mxu0 0
        %1100 = vmatpush2.bf16.msra.mxu0 0
        %1101 = vmatprep.subr.bf16.mxu0 0
        %1102 = vmatpush2.bf16.msra.mxu0 0
        %1103 = vmatprep.subr.bf16.mxu0 0
        %1104 = vmatpush2.bf16.msra.mxu0 0
        %1105 = vmatprep.mubr.bf16.mxu0 0
        %1106 = vmatmul.mubr.bf16.gmra.mxu0 %v1067
        %v1107 = vpop.f32.mrf.mxu0
        %v1108 = vadd.f32 0.0, %v1107
        %v1109 = vpop.f32.mrf.mxu0
        %v1110 = vpop.f32.mrf.mxu0
        %v1111 = vpop.f32.mrf.mxu0
        %1112 = vdwg.mxu0
        %1113 = vrot.lane.b32.xlu0 %v816, 64
        %v1114 = vpop.permute.xlu0 %1113
        %v1116 = vsel %vm822, %v1061, 0
        %v1119 = vsel %vm1069, %v1114, 0
        %1121 = vmatprep.subr.bf16.mxu0 0
        %1122 = vmatpush1.bf16.msra.mxu0 0
        %1123 = vmatprep.subr.bf16.mxu0 0
        %1124 = vmatpush1.bf16.msra.mxu0 0
        %1125 = vmatprep.subr.bf16.mxu0 0
        %1126 = vmatpush1.bf16.msra.mxu0 0
        %1127 = vmatprep.subr.bf16.mxu0 0
        %1128 = vmatpush1.bf16.msra.mxu0 0
        %1129 = vmatprep.subr.bf16.mxu0 0
        %1130 = vmatpush1.bf16.msra.mxu0 0
        %1131 = vmatprep.subr.bf16.mxu0 0
        %1132 = vmatpush1.bf16.msra.mxu0 0
        %1133 = vmatprep.subr.bf16.mxu0 0
        %1134 = vmatpush1.bf16.msra.mxu0 0
        %1135 = vmatprep.subr.bf16.mxu0 0
        %1136 = vmatpush1.bf16.msra.mxu0 %v1119
        %1137 = vmatprep.subr.bf16.mxu0 0
        %1138 = vmatpush2.bf16.msra.mxu0 0
        %1139 = vmatprep.subr.bf16.mxu0 0
        %1140 = vmatpush2.bf16.msra.mxu0 0
        %1141 = vmatprep.subr.bf16.mxu0 0
        %1142 = vmatpush2.bf16.msra.mxu0 0
        %1143 = vmatprep.subr.bf16.mxu0 0
        %1144 = vmatpush2.bf16.msra.mxu0 0
        %1145 = vmatprep.subr.bf16.mxu0 0
        %1146 = vmatpush2.bf16.msra.mxu0 0
        %1147 = vmatprep.subr.bf16.mxu0 0
        %1148 = vmatpush2.bf16.msra.mxu0 0
        %1149 = vmatprep.subr.bf16.mxu0 0
        %1150 = vmatpush2.bf16.msra.mxu0 0
        %1151 = vmatprep.subr.bf16.mxu0 0
        %1152 = vmatpush2.bf16.msra.mxu0 0
        %1153 = vmatprep.mubr.bf16.mxu0 0
        %1154 = vmatmul.mubr.bf16.gmra.mxu0 %v1116
        %v1155 = vpop.f32.mrf.mxu0
        %v1156 = vadd.f32 0.0, %v1155
        %v1157 = vpop.f32.mrf.mxu0
        %v1158 = vpop.f32.mrf.mxu0
        %v1159 = vpop.f32.mrf.mxu0
        %1160 = vdwg.mxu0
        %1161 = vrot.lane.b32.xlu0 %v817, 64
        %v1162 = vpop.permute.xlu0 %1161
        %v1164 = vsel %vm822, %v1062, 0
        %v1167 = vsel %vm1069, %v1162, 0
        %1169 = vmatprep.subr.bf16.mxu0 0
        %1170 = vmatpush1.bf16.msra.mxu0 0
        %1171 = vmatprep.subr.bf16.mxu0 0
        %1172 = vmatpush1.bf16.msra.mxu0 0
        %1173 = vmatprep.subr.bf16.mxu0 0
        %1174 = vmatpush1.bf16.msra.mxu0 0
        %1175 = vmatprep.subr.bf16.mxu0 0
        %1176 = vmatpush1.bf16.msra.mxu0 0
        %1177 = vmatprep.subr.bf16.mxu0 0
        %1178 = vmatpush1.bf16.msra.mxu0 0
        %1179 = vmatprep.subr.bf16.mxu0 0
        %1180 = vmatpush1.bf16.msra.mxu0 0
        %1181 = vmatprep.subr.bf16.mxu0 0
        %1182 = vmatpush1.bf16.msra.mxu0 0
        %1183 = vmatprep.subr.bf16.mxu0 0
        %1184 = vmatpush1.bf16.msra.mxu0 %v1167
        %1185 = vmatprep.subr.bf16.mxu0 0
        %1186 = vmatpush2.bf16.msra.mxu0 0
        %1187 = vmatprep.subr.bf16.mxu0 0
        %1188 = vmatpush2.bf16.msra.mxu0 0
        %1189 = vmatprep.subr.bf16.mxu0 0
        %1190 = vmatpush2.bf16.msra.mxu0 0
        %1191 = vmatprep.subr.bf16.mxu0 0
        %1192 = vmatpush2.bf16.msra.mxu0 0
        %1193 = vmatprep.subr.bf16.mxu0 0
        %1194 = vmatpush2.bf16.msra.mxu0 0
        %1195 = vmatprep.subr.bf16.mxu0 0
        %1196 = vmatpush2.bf16.msra.mxu0 0
        %1197 = vmatprep.subr.bf16.mxu0 0
        %1198 = vmatpush2.bf16.msra.mxu0 0
        %1199 = vmatprep.subr.bf16.mxu0 0
        %1200 = vmatpush2.bf16.msra.mxu0 0
        %1201 = vmatprep.mubr.bf16.mxu0 0
        %1202 = vmatmul.mubr.bf16.gmra.mxu0 %v1164
        %v1203 = vpop.f32.mrf.mxu0
        %v1204 = vadd.f32 0.0, %v1203
        %v1205 = vpop.f32.mrf.mxu0
        %v1206 = vpop.f32.mrf.mxu0
        %v1207 = vpop.f32.mrf.mxu0
        %1208 = vdwg.mxu0
        %1209 = vrot.lane.b32.xlu0 %v818, 64
        %v1210 = vpop.permute.xlu0 %1209
        %v1212 = vsel %vm822, %v1063, 0
        %v1215 = vsel %vm1069, %v1210, 0
        %1217 = vmatprep.subr.bf16.mxu0 0
        %1218 = vmatpush1.bf16.msra.mxu0 0
        %1219 = vmatprep.subr.bf16.mxu0 0
        %1220 = vmatpush1.bf16.msra.mxu0 0
        %1221 = vmatprep.subr.bf16.mxu0 0
        %1222 = vmatpush1.bf16.msra.mxu0 0
        %1223 = vmatprep.subr.bf16.mxu0 0
        %1224 = vmatpush1.bf16.msra.mxu0 0
        %1225 = vmatprep.subr.bf16.mxu0 0
        %1226 = vmatpush1.bf16.msra.mxu0 0
        %1227 = vmatprep.subr.bf16.mxu0 0
        %1228 = vmatpush1.bf16.msra.mxu0 0
        %1229 = vmatprep.subr.bf16.mxu0 0
        %1230 = vmatpush1.bf16.msra.mxu0 0
        %1231 = vmatprep.subr.bf16.mxu0 0
        %1232 = vmatpush1.bf16.msra.mxu0 %v1215
        %1233 = vmatprep.subr.bf16.mxu0 0
        %1234 = vmatpush2.bf16.msra.mxu0 0
        %1235 = vmatprep.subr.bf16.mxu0 0
        %1236 = vmatpush2.bf16.msra.mxu0 0
        %1237 = vmatprep.subr.bf16.mxu0 0
        %1238 = vmatpush2.bf16.msra.mxu0 0
        %1239 = vmatprep.subr.bf16.mxu0 0
        %1240 = vmatpush2.bf16.msra.mxu0 0
        %1241 = vmatprep.subr.bf16.mxu0 0
        %1242 = vmatpush2.bf16.msra.mxu0 0
        %1243 = vmatprep.subr.bf16.mxu0 0
        %1244 = vmatpush2.bf16.msra.mxu0 0
        %1245 = vmatprep.subr.bf16.mxu0 0
        %1246 = vmatpush2.bf16.msra.mxu0 0
        %1247 = vmatprep.subr.bf16.mxu0 0
        %1248 = vmatpush2.bf16.msra.mxu0 0
        %1249 = vmatprep.mubr.bf16.mxu0 0
        %1250 = vmatmul.mubr.bf16.gmra.mxu0 %v1212
        %v1251 = vpop.f32.mrf.mxu0
        %v1252 = vadd.f32 0.0, %v1251
        %v1253 = vpop.f32.mrf.mxu0
        %v1254 = vpop.f32.mrf.mxu0
        %v1255 = vpop.f32.mrf.mxu0
        %1256 = vdwg.mxu0
        %v1257 = vpack.c.bf16 %v1108, %v1108
        %v1258 = vpack.c.bf16 %v1156, %v1156
        %v1259 = vpack.c.bf16 %v1204, %v1204
        %v1260 = vpack.c.bf16 %v1252, %v1252
        %v1262 = vsel %vm822, %v1257, 0
        %v1265 = vsel %vm1069, %v801, 0
        %1267 = vmatprep.subr.bf16.mxu0 0
        %1268 = vmatpush1.bf16.msra.mxu0 0
        %1269 = vmatprep.subr.bf16.mxu0 0
        %1270 = vmatpush1.bf16.msra.mxu0 0
        %1271 = vmatprep.subr.bf16.mxu0 0
        %1272 = vmatpush1.bf16.msra.mxu0 0
        %1273 = vmatprep.subr.bf16.mxu0 0
        %1274 = vmatpush1.bf16.msra.mxu0 0
        %1275 = vmatprep.subr.bf16.mxu0 0
        %1276 = vmatpush1.bf16.msra.mxu0 0
        %1277 = vmatprep.subr.bf16.mxu0 0
        %1278 = vmatpush1.bf16.msra.mxu0 0
        %1279 = vmatprep.subr.bf16.mxu0 0
        %1280 = vmatpush1.bf16.msra.mxu0 0
        %1281 = vmatprep.subr.bf16.mxu0 0
        %1282 = vmatpush1.bf16.msra.mxu0 %v1265
        %1283 = vmatprep.subr.bf16.mxu0 0
        %1284 = vmatpush2.bf16.msra.mxu0 0
        %1285 = vmatprep.subr.bf16.mxu0 0
        %1286 = vmatpush2.bf16.msra.mxu0 0
        %1287 = vmatprep.subr.bf16.mxu0 0
        %1288 = vmatpush2.bf16.msra.mxu0 0
        %1289 = vmatprep.subr.bf16.mxu0 0
        %1290 = vmatpush2.bf16.msra.mxu0 0
        %1291 = vmatprep.subr.bf16.mxu0 0
        %1292 = vmatpush2.bf16.msra.mxu0 0
        %1293 = vmatprep.subr.bf16.mxu0 0
        %1294 = vmatpush2.bf16.msra.mxu0 0
        %1295 = vmatprep.subr.bf16.mxu0 0
        %1296 = vmatpush2.bf16.msra.mxu0 0
        %1297 = vmatprep.subr.bf16.mxu0 0
        %1298 = vmatpush2.bf16.msra.mxu0 0
        %1299 = vmatprep.mubr.bf16.mxu0 0
        %1300 = vmatmul.mubr.bf16.gmra.mxu0 %v1262
        %v1301 = vpop.f32.mrf.mxu0
        %v1302 = vadd.f32 0.0, %v1301
        %v1303 = vpop.f32.mrf.mxu0
        %v1304 = vpop.f32.mrf.mxu0
        %v1305 = vpop.f32.mrf.mxu0
        %1306 = vdwg.mxu0
        %v1308 = vsel %vm822, %v1258, 0
        %v1311 = vsel %vm1069, %v802, 0
        %1313 = vmatprep.subr.bf16.mxu0 0
        %1314 = vmatpush1.bf16.msra.mxu0 0
        %1315 = vmatprep.subr.bf16.mxu0 0
        %1316 = vmatpush1.bf16.msra.mxu0 0
        %1317 = vmatprep.subr.bf16.mxu0 0
        %1318 = vmatpush1.bf16.msra.mxu0 0
        %1319 = vmatprep.subr.bf16.mxu0 0
        %1320 = vmatpush1.bf16.msra.mxu0 0
        %1321 = vmatprep.subr.bf16.mxu0 0
        %1322 = vmatpush1.bf16.msra.mxu0 0
        %1323 = vmatprep.subr.bf16.mxu0 0
        %1324 = vmatpush1.bf16.msra.mxu0 0
        %1325 = vmatprep.subr.bf16.mxu0 0
        %1326 = vmatpush1.bf16.msra.mxu0 0
        %1327 = vmatprep.subr.bf16.mxu0 0
        %1328 = vmatpush1.bf16.msra.mxu0 %v1311
        %1329 = vmatprep.subr.bf16.mxu0 0
        %1330 = vmatpush2.bf16.msra.mxu0 0
        %1331 = vmatprep.subr.bf16.mxu0 0
        %1332 = vmatpush2.bf16.msra.mxu0 0
        %1333 = vmatprep.subr.bf16.mxu0 0
        %1334 = vmatpush2.bf16.msra.mxu0 0
        %1335 = vmatprep.subr.bf16.mxu0 0
        %1336 = vmatpush2.bf16.msra.mxu0 0
        %1337 = vmatprep.subr.bf16.mxu0 0
        %1338 = vmatpush2.bf16.msra.mxu0 0
        %1339 = vmatprep.subr.bf16.mxu0 0
        %1340 = vmatpush2.bf16.msra.mxu0 0
        %1341 = vmatprep.subr.bf16.mxu0 0
        %1342 = vmatpush2.bf16.msra.mxu0 0
        %1343 = vmatprep.subr.bf16.mxu0 0
        %1344 = vmatpush2.bf16.msra.mxu0 0
        %1345 = vmatprep.mubr.bf16.mxu0 0
        %1346 = vmatmul.mubr.bf16.gmra.mxu0 %v1308
        %v1347 = vpop.f32.mrf.mxu0
        %v1348 = vadd.f32 0.0, %v1347
        %v1349 = vpop.f32.mrf.mxu0
        %v1350 = vpop.f32.mrf.mxu0
        %v1351 = vpop.f32.mrf.mxu0
        %1352 = vdwg.mxu0
        %v1354 = vsel %vm822, %v1259, 0
        %v1357 = vsel %vm1069, %v803, 0
        %1359 = vmatprep.subr.bf16.mxu0 0
        %1360 = vmatpush1.bf16.msra.mxu0 0
        %1361 = vmatprep.subr.bf16.mxu0 0
        %1362 = vmatpush1.bf16.msra.mxu0 0
        %1363 = vmatprep.subr.bf16.mxu0 0
        %1364 = vmatpush1.bf16.msra.mxu0 0
        %1365 = vmatprep.subr.bf16.mxu0 0
        %1366 = vmatpush1.bf16.msra.mxu0 0
        %1367 = vmatprep.subr.bf16.mxu0 0
        %1368 = vmatpush1.bf16.msra.mxu0 0
        %1369 = vmatprep.subr.bf16.mxu0 0
        %1370 = vmatpush1.bf16.msra.mxu0 0
        %1371 = vmatprep.subr.bf16.mxu0 0
        %1372 = vmatpush1.bf16.msra.mxu0 0
        %1373 = vmatprep.subr.bf16.mxu0 0
        %1374 = vmatpush1.bf16.msra.mxu0 %v1357
        %1375 = vmatprep.subr.bf16.mxu0 0
        %1376 = vmatpush2.bf16.msra.mxu0 0
        %1377 = vmatprep.subr.bf16.mxu0 0
        %1378 = vmatpush2.bf16.msra.mxu0 0
        %1379 = vmatprep.subr.bf16.mxu0 0
        %1380 = vmatpush2.bf16.msra.mxu0 0
        %1381 = vmatprep.subr.bf16.mxu0 0
        %1382 = vmatpush2.bf16.msra.mxu0 0
        %1383 = vmatprep.subr.bf16.mxu0 0
        %1384 = vmatpush2.bf16.msra.mxu0 0
        %1385 = vmatprep.subr.bf16.mxu0 0
        %1386 = vmatpush2.bf16.msra.mxu0 0
        %1387 = vmatprep.subr.bf16.mxu0 0
        %1388 = vmatpush2.bf16.msra.mxu0 0
        %1389 = vmatprep.subr.bf16.mxu0 0
        %1390 = vmatpush2.bf16.msra.mxu0 0
        %1391 = vmatprep.mubr.bf16.mxu0 0
        %1392 = vmatmul.mubr.bf16.gmra.mxu0 %v1354
        %v1393 = vpop.f32.mrf.mxu0
        %v1394 = vadd.f32 0.0, %v1393
        %v1395 = vpop.f32.mrf.mxu0
        %v1396 = vpop.f32.mrf.mxu0
        %v1397 = vpop.f32.mrf.mxu0
        %1398 = vdwg.mxu0
        %v1400 = vsel %vm822, %v1260, 0
        %v1403 = vsel %vm1069, %v804, 0
        %1405 = vmatprep.subr.bf16.mxu0 0
        %1406 = vmatpush1.bf16.msra.mxu0 0
        %1407 = vmatprep.subr.bf16.mxu0 0
        %1408 = vmatpush1.bf16.msra.mxu0 0
        %1409 = vmatprep.subr.bf16.mxu0 0
        %1410 = vmatpush1.bf16.msra.mxu0 0
        %1411 = vmatprep.subr.bf16.mxu0 0
        %1412 = vmatpush1.bf16.msra.mxu0 0
        %1413 = vmatprep.subr.bf16.mxu0 0
        %1414 = vmatpush1.bf16.msra.mxu0 0
        %1415 = vmatprep.subr.bf16.mxu0 0
        %1416 = vmatpush1.bf16.msra.mxu0 0
        %1417 = vmatprep.subr.bf16.mxu0 0
        %1418 = vmatpush1.bf16.msra.mxu0 0
        %1419 = vmatprep.subr.bf16.mxu0 0
        %1420 = vmatpush1.bf16.msra.mxu0 %v1403
        %1421 = vmatprep.subr.bf16.mxu0 0
        %1422 = vmatpush2.bf16.msra.mxu0 0
        %1423 = vmatprep.subr.bf16.mxu0 0
        %1424 = vmatpush2.bf16.msra.mxu0 0
        %1425 = vmatprep.subr.bf16.mxu0 0
        %1426 = vmatpush2.bf16.msra.mxu0 0
        %1427 = vmatprep.subr.bf16.mxu0 0
        %1428 = vmatpush2.bf16.msra.mxu0 0
        %1429 = vmatprep.subr.bf16.mxu0 0
        %1430 = vmatpush2.bf16.msra.mxu0 0
        %1431 = vmatprep.subr.bf16.mxu0 0
        %1432 = vmatpush2.bf16.msra.mxu0 0
        %1433 = vmatprep.subr.bf16.mxu0 0
        %1434 = vmatpush2.bf16.msra.mxu0 0
        %1435 = vmatprep.subr.bf16.mxu0 0
        %1436 = vmatpush2.bf16.msra.mxu0 0
        %1437 = vmatprep.mubr.bf16.mxu0 0
        %1438 = vmatmul.mubr.bf16.gmra.mxu0 %v1400
        %v1439 = vpop.f32.mrf.mxu0
        %v1440 = vadd.f32 0.0, %v1439
        %v1441 = vpop.f32.mrf.mxu0
        %v1442 = vpop.f32.mrf.mxu0
        %v1443 = vpop.f32.mrf.mxu0
        %1444 = vdwg.mxu0
        %v1445 = vsel %vm683, %v1302, 0.0
        %v1446 = vsel %vm683, %v1348, 0.0
        %v1447 = vadd.f32 %v1445, %v1446
        %v1448 = vsel %vm683, %v1394, 0.0
        %v1449 = vadd.f32 %v1447, %v1448
        %v1450 = vsel %vm683, %v1440, 0.0
        %v1451 = vadd.f32 %v1449, %v1450
        %1453 = vrot.lane.b32.xlu0 %v792, 120
        %v1454 = vpop.permute.xlu0 %1453
        %1456 = vrot.lane.b32.xlu0 %v792, 112
        %v1457 = vpop.permute.xlu0 %1456
        %1459 = vrot.lane.b32.xlu0 %v792, 104
        %v1460 = vpop.permute.xlu0 %1459
        %v1462 = vpack.c.bf16 %v792, %v792
        %v1463 = vpack.c.bf16 %v1454, %v1454
        %v1464 = vpack.c.bf16 %v1457, %v1457
        %v1465 = vpack.c.bf16 %v1460, %v1460
        %1467 = vrot.lane.b32.xlu0 %v1462, 96
        %v1468 = vpop.permute.xlu0 %1467
        %v1470 = vsel %vm822, %v1462, 0
        %v1473 = vsel %vm822, %v1468, 0
        %1475 = vmatprep.subr.bf16.mxu0 0
        %1476 = vmatpush1.bf16.xpose.msra.mxu0 0
        %1477 = vmatprep.subr.bf16.mxu0 0
        %1478 = vmatpush1.bf16.xpose.msra.mxu0 0
        %1479 = vmatprep.subr.bf16.mxu0 0
        %1480 = vmatpush1.bf16.xpose.msra.mxu0 0
        %1481 = vmatprep.subr.bf16.mxu0 0
        %1482 = vmatpush1.bf16.xpose.msra.mxu0 0
        %1483 = vmatprep.subr.bf16.mxu0 0
        %1484 = vmatpush1.bf16.xpose.msra.mxu0 0
        %1485 = vmatprep.subr.bf16.mxu0 0
        %1486 = vmatpush1.bf16.xpose.msra.mxu0 0
        %1487 = vmatprep.subr.bf16.mxu0 0
        %1488 = vmatpush1.bf16.xpose.msra.mxu0 0
        %1489 = vmatprep.subr.bf16.mxu0 0
        %1490 = vmatpush1.bf16.xpose.msra.mxu0 %v1473
        %1491 = vmatprep.subr.bf16.mxu0 0
        %1492 = vmatpush2.bf16.xpose.msra.mxu0 0
        %1493 = vmatprep.subr.bf16.mxu0 0
        %1494 = vmatpush2.bf16.xpose.msra.mxu0 0
        %1495 = vmatprep.subr.bf16.mxu0 0
        %1496 = vmatpush2.bf16.xpose.msra.mxu0 0
        %1497 = vmatprep.subr.bf16.mxu0 0
        %1498 = vmatpush2.bf16.xpose.msra.mxu0 0
        %1499 = vmatprep.subr.bf16.mxu0 0
        %1500 = vmatpush2.bf16.xpose.msra.mxu0 0
        %1501 = vmatprep.subr.bf16.mxu0 0
        %1502 = vmatpush2.bf16.xpose.msra.mxu0 0
        %1503 = vmatprep.subr.bf16.mxu0 0
        %1504 = vmatpush2.bf16.xpose.msra.mxu0 0
        %1505 = vmatprep.subr.bf16.mxu0 0
        %1506 = vmatpush2.bf16.xpose.msra.mxu0 0
        %1507 = vmatprep.mubr.bf16.mxu0 0
        %1508 = vmatmul.mubr.bf16.gmra.mxu0 %v1470
        %v1509 = vpop.f32.mrf.mxu0
        %v1510 = vadd.f32 %v800, %v1509
        %v1511 = vpop.f32.mrf.mxu0
        %v1512 = vpop.f32.mrf.mxu0
        %v1513 = vpop.f32.mrf.mxu0
        %1514 = vdwg.mxu0
        %1516 = vrot.lane.b32.xlu0 %v1463, 96
        %v1517 = vpop.permute.xlu0 %1516
        %v1519 = vsel %vm822, %v1463, 0
        %v1522 = vsel %vm822, %v1517, 0
        %1524 = vmatprep.subr.bf16.mxu0 0
        %1525 = vmatpush1.bf16.xpose.msra.mxu0 0
        %1526 = vmatprep.subr.bf16.mxu0 0
        %1527 = vmatpush1.bf16.xpose.msra.mxu0 0
        %1528 = vmatprep.subr.bf16.mxu0 0
        %1529 = vmatpush1.bf16.xpose.msra.mxu0 0
        %1530 = vmatprep.subr.bf16.mxu0 0
        %1531 = vmatpush1.bf16.xpose.msra.mxu0 0
        %1532 = vmatprep.subr.bf16.mxu0 0
        %1533 = vmatpush1.bf16.xpose.msra.mxu0 0
        %1534 = vmatprep.subr.bf16.mxu0 0
        %1535 = vmatpush1.bf16.xpose.msra.mxu0 0
        %1536 = vmatprep.subr.bf16.mxu0 0
        %1537 = vmatpush1.bf16.xpose.msra.mxu0 0
        %1538 = vmatprep.subr.bf16.mxu0 0
        %1539 = vmatpush1.bf16.xpose.msra.mxu0 %v1522
        %1540 = vmatprep.subr.bf16.mxu0 0
        %1541 = vmatpush2.bf16.xpose.msra.mxu0 0
        %1542 = vmatprep.subr.bf16.mxu0 0
        %1543 = vmatpush2.bf16.xpose.msra.mxu0 0
        %1544 = vmatprep.subr.bf16.mxu0 0
        %1545 = vmatpush2.bf16.xpose.msra.mxu0 0
        %1546 = vmatprep.subr.bf16.mxu0 0
        %1547 = vmatpush2.bf16.xpose.msra.mxu0 0
        %1548 = vmatprep.subr.bf16.mxu0 0
        %1549 = vmatpush2.bf16.xpose.msra.mxu0 0
        %1550 = vmatprep.subr.bf16.mxu0 0
        %1551 = vmatpush2.bf16.xpose.msra.mxu0 0
        %1552 = vmatprep.subr.bf16.mxu0 0
        %1553 = vmatpush2.bf16.xpose.msra.mxu0 0
        %1554 = vmatprep.subr.bf16.mxu0 0
        %1555 = vmatpush2.bf16.xpose.msra.mxu0 0
        %1556 = vmatprep.mubr.bf16.mxu0 0
        %1557 = vmatmul.mubr.bf16.gmra.mxu0 %v1519
        %v1558 = vpop.f32.mrf.mxu0
        %v1559 = vadd.f32 %v800, %v1558
        %v1560 = vpop.f32.mrf.mxu0
        %v1561 = vpop.f32.mrf.mxu0
        %v1562 = vpop.f32.mrf.mxu0
        %1563 = vdwg.mxu0
        %1565 = vrot.lane.b32.xlu0 %v1464, 96
        %v1566 = vpop.permute.xlu0 %1565
        %v1568 = vsel %vm822, %v1464, 0
        %v1571 = vsel %vm822, %v1566, 0
        %1573 = vmatprep.subr.bf16.mxu0 0
        %1574 = vmatpush1.bf16.xpose.msra.mxu0 0
        %1575 = vmatprep.subr.bf16.mxu0 0
        %1576 = vmatpush1.bf16.xpose.msra.mxu0 0
        %1577 = vmatprep.subr.bf16.mxu0 0
        %1578 = vmatpush1.bf16.xpose.msra.mxu0 0
        %1579 = vmatprep.subr.bf16.mxu0 0
        %1580 = vmatpush1.bf16.xpose.msra.mxu0 0
        %1581 = vmatprep.subr.bf16.mxu0 0
        %1582 = vmatpush1.bf16.xpose.msra.mxu0 0
        %1583 = vmatprep.subr.bf16.mxu0 0
        %1584 = vmatpush1.bf16.xpose.msra.mxu0 0
        %1585 = vmatprep.subr.bf16.mxu0 0
        %1586 = vmatpush1.bf16.xpose.msra.mxu0 0
        %1587 = vmatprep.subr.bf16.mxu0 0
        %1588 = vmatpush1.bf16.xpose.msra.mxu0 %v1571
        %1589 = vmatprep.subr.bf16.mxu0 0
        %1590 = vmatpush2.bf16.xpose.msra.mxu0 0
        %1591 = vmatprep.subr.bf16.mxu0 0
        %1592 = vmatpush2.bf16.xpose.msra.mxu0 0
        %1593 = vmatprep.subr.bf16.mxu0 0
        %1594 = vmatpush2.bf16.xpose.msra.mxu0 0
        %1595 = vmatprep.subr.bf16.mxu0 0
        %1596 = vmatpush2.bf16.xpose.msra.mxu0 0
        %1597 = vmatprep.subr.bf16.mxu0 0
        %1598 = vmatpush2.bf16.xpose.msra.mxu0 0
        %1599 = vmatprep.subr.bf16.mxu0 0
        %1600 = vmatpush2.bf16.xpose.msra.mxu0 0
        %1601 = vmatprep.subr.bf16.mxu0 0
        %1602 = vmatpush2.bf16.xpose.msra.mxu0 0
        %1603 = vmatprep.subr.bf16.mxu0 0
        %1604 = vmatpush2.bf16.xpose.msra.mxu0 0
        %1605 = vmatprep.mubr.bf16.mxu0 0
        %1606 = vmatmul.mubr.bf16.gmra.mxu0 %v1568
        %v1607 = vpop.f32.mrf.mxu0
        %v1608 = vadd.f32 %v800, %v1607
        %v1609 = vpop.f32.mrf.mxu0
        %v1610 = vpop.f32.mrf.mxu0
        %v1611 = vpop.f32.mrf.mxu0
        %1612 = vdwg.mxu0
        %1614 = vrot.lane.b32.xlu0 %v1465, 96
        %v1615 = vpop.permute.xlu0 %1614
        %v1617 = vsel %vm822, %v1465, 0
        %v1620 = vsel %vm822, %v1615, 0
        %1622 = vmatprep.subr.bf16.mxu0 0
        %1623 = vmatpush1.bf16.xpose.msra.mxu0 0
        %1624 = vmatprep.subr.bf16.mxu0 0
        %1625 = vmatpush1.bf16.xpose.msra.mxu0 0
        %1626 = vmatprep.subr.bf16.mxu0 0
        %1627 = vmatpush1.bf16.xpose.msra.mxu0 0
        %1628 = vmatprep.subr.bf16.mxu0 0
        %1629 = vmatpush1.bf16.xpose.msra.mxu0 0
        %1630 = vmatprep.subr.bf16.mxu0 0
        %1631 = vmatpush1.bf16.xpose.msra.mxu0 0
        %1632 = vmatprep.subr.bf16.mxu0 0
        %1633 = vmatpush1.bf16.xpose.msra.mxu0 0
        %1634 = vmatprep.subr.bf16.mxu0 0
        %1635 = vmatpush1.bf16.xpose.msra.mxu0 0
        %1636 = vmatprep.subr.bf16.mxu0 0
        %1637 = vmatpush1.bf16.xpose.msra.mxu0 %v1620
        %1638 = vmatprep.subr.bf16.mxu0 0
        %1639 = vmatpush2.bf16.xpose.msra.mxu0 0
        %1640 = vmatprep.subr.bf16.mxu0 0
        %1641 = vmatpush2.bf16.xpose.msra.mxu0 0
        %1642 = vmatprep.subr.bf16.mxu0 0
        %1643 = vmatpush2.bf16.xpose.msra.mxu0 0
        %1644 = vmatprep.subr.bf16.mxu0 0
        %1645 = vmatpush2.bf16.xpose.msra.mxu0 0
        %1646 = vmatprep.subr.bf16.mxu0 0
        %1647 = vmatpush2.bf16.xpose.msra.mxu0 0
        %1648 = vmatprep.subr.bf16.mxu0 0
        %1649 = vmatpush2.bf16.xpose.msra.mxu0 0
        %1650 = vmatprep.subr.bf16.mxu0 0
        %1651 = vmatpush2.bf16.xpose.msra.mxu0 0
        %1652 = vmatprep.subr.bf16.mxu0 0
        %1653 = vmatpush2.bf16.xpose.msra.mxu0 0
        %1654 = vmatprep.mubr.bf16.mxu0 0
        %1655 = vmatmul.mubr.bf16.gmra.mxu0 %v1617
        %v1656 = vpop.f32.mrf.mxu0
        %v1657 = vadd.f32 %v800, %v1656
        %v1658 = vpop.f32.mrf.mxu0
        %v1659 = vpop.f32.mrf.mxu0
        %v1660 = vpop.f32.mrf.mxu0
        %1661 = vdwg.mxu0
        %v1662 = vsel %vm822, %v1510, -inf
        %1663 = vmax.xlane.f32.xlu0 %v1662
        %v1664 = vpop.xlane.xlu0 %1663
        %v1665 = vsel %vm822, %v1559, -inf
        %1666 = vmax.xlane.f32.xlu0 %v1665
        %v1667 = vpop.xlane.xlu0 %1666
        %v1668 = vsel %vm822, %v1608, -inf
        %1669 = vmax.xlane.f32.xlu0 %v1668
        %v1670 = vpop.xlane.xlu0 %1669
        %v1671 = vsel %vm822, %v1657, -inf
        %1672 = vmax.xlane.f32.xlu0 %v1671
        %v1673 = vpop.xlane.xlu0 %1672
        %v1674 = vsub.f32 %v1510, %v1664
        %v1675 = vsub.f32 %v1559, %v1667
        %v1676 = vsub.f32 %v1608, %v1670
        %v1677 = vsub.f32 %v1657, %v1673
        %v1678 = vmul.f32 %v1674, 1.442695
        %v1679 = vpow.pop %v1678
        %v1680 = vmul.f32 %v1675, 1.442695
        %v1681 = vpow.pop %v1680
        %v1682 = vmul.f32 %v1676, 1.442695
        %v1683 = vpow.pop %v1682
        %v1684 = vmul.f32 %v1677, 1.442695
        %v1685 = vpow.pop %v1684
        %v1686 = vsel %vm822, %v1679, 0.0
        %1687 = vadd.xlane.f32.xlu0 %v1686
        %v1688 = vpop.xlane.xlu0 %1687
        %v1689 = vsel %vm822, %v1681, 0.0
        %1690 = vadd.xlane.f32.xlu0 %v1689
        %v1691 = vpop.xlane.xlu0 %1690
        %v1692 = vsel %vm822, %v1683, 0.0
        %1693 = vadd.xlane.f32.xlu0 %v1692
        %v1694 = vpop.xlane.xlu0 %1693
        %v1695 = vsel %vm822, %v1685, 0.0
        %1696 = vadd.xlane.f32.xlu0 %v1695
        %v1697 = vpop.xlane.xlu0 %1696
        %v1698 = vrcp.pop %v1688
        %v1699 = vrcp.pop %v1691
        %v1700 = vrcp.pop %v1694
        %v1701 = vrcp.pop %v1697
        %v1702 = vmul.f32 %v1679, %v1698
        %v1703 = vmul.f32 %v1681, %v1699
        %v1704 = vmul.f32 %v1683, %v1700
        %v1705 = vmul.f32 %v1685, %v1701
        %v1706 = vpack.c.bf16 %v1702, %v1702
        %v1707 = vpack.c.bf16 %v1703, %v1703
        %v1708 = vpack.c.bf16 %v1704, %v1704
        %v1709 = vpack.c.bf16 %v1705, %v1705
        %1710 = vrot.lane.b32.xlu0 %v1462, 64
        %v1711 = vpop.permute.xlu0 %1710
        %v1713 = vsel %vm822, %v1706, 0
        %v1716 = vsel %vm1069, %v1711, 0
        %1718 = vmatprep.subr.bf16.mxu0 0
        %1719 = vmatpush1.bf16.msra.mxu0 0
        %1720 = vmatprep.subr.bf16.mxu0 0
        %1721 = vmatpush1.bf16.msra.mxu0 0
        %1722 = vmatprep.subr.bf16.mxu0 0
        %1723 = vmatpush1.bf16.msra.mxu0 0
        %1724 = vmatprep.subr.bf16.mxu0 0
        %1725 = vmatpush1.bf16.msra.mxu0 0
        %1726 = vmatprep.subr.bf16.mxu0 0
        %1727 = vmatpush1.bf16.msra.mxu0 0
        %1728 = vmatprep.subr.bf16.mxu0 0
        %1729 = vmatpush1.bf16.msra.mxu0 0
        %1730 = vmatprep.subr.bf16.mxu0 0
        %1731 = vmatpush1.bf16.msra.mxu0 0
        %1732 = vmatprep.subr.bf16.mxu0 0
        %1733 = vmatpush1.bf16.msra.mxu0 %v1716
        %1734 = vmatprep.subr.bf16.mxu0 0
        %1735 = vmatpush2.bf16.msra.mxu0 0
        %1736 = vmatprep.subr.bf16.mxu0 0
        %1737 = vmatpush2.bf16.msra.mxu0 0
        %1738 = vmatprep.subr.bf16.mxu0 0
        %1739 = vmatpush2.bf16.msra.mxu0 0
        %1740 = vmatprep.subr.bf16.mxu0 0
        %1741 = vmatpush2.bf16.msra.mxu0 0
        %1742 = vmatprep.subr.bf16.mxu0 0
        %1743 = vmatpush2.bf16.msra.mxu0 0
        %1744 = vmatprep.subr.bf16.mxu0 0
        %1745 = vmatpush2.bf16.msra.mxu0 0
        %1746 = vmatprep.subr.bf16.mxu0 0
        %1747 = vmatpush2.bf16.msra.mxu0 0
        %1748 = vmatprep.subr.bf16.mxu0 0
        %1749 = vmatpush2.bf16.msra.mxu0 0
        %1750 = vmatprep.mubr.bf16.mxu0 0
        %1751 = vmatmul.mubr.bf16.gmra.mxu0 %v1713
        %v1752 = vpop.f32.mrf.mxu0
        %v1753 = vadd.f32 0.0, %v1752
        %v1754 = vpop.f32.mrf.mxu0
        %v1755 = vpop.f32.mrf.mxu0
        %v1756 = vpop.f32.mrf.mxu0
        %1757 = vdwg.mxu0
        %1758 = vrot.lane.b32.xlu0 %v1463, 64
        %v1759 = vpop.permute.xlu0 %1758
        %v1761 = vsel %vm822, %v1707, 0
        %v1764 = vsel %vm1069, %v1759, 0
        %1766 = vmatprep.subr.bf16.mxu0 0
        %1767 = vmatpush1.bf16.msra.mxu0 0
        %1768 = vmatprep.subr.bf16.mxu0 0
        %1769 = vmatpush1.bf16.msra.mxu0 0
        %1770 = vmatprep.subr.bf16.mxu0 0
        %1771 = vmatpush1.bf16.msra.mxu0 0
        %1772 = vmatprep.subr.bf16.mxu0 0
        %1773 = vmatpush1.bf16.msra.mxu0 0
        %1774 = vmatprep.subr.bf16.mxu0 0
        %1775 = vmatpush1.bf16.msra.mxu0 0
        %1776 = vmatprep.subr.bf16.mxu0 0
        %1777 = vmatpush1.bf16.msra.mxu0 0
        %1778 = vmatprep.subr.bf16.mxu0 0
        %1779 = vmatpush1.bf16.msra.mxu0 0
        %1780 = vmatprep.subr.bf16.mxu0 0
        %1781 = vmatpush1.bf16.msra.mxu0 %v1764
        %1782 = vmatprep.subr.bf16.mxu0 0
        %1783 = vmatpush2.bf16.msra.mxu0 0
        %1784 = vmatprep.subr.bf16.mxu0 0
        %1785 = vmatpush2.bf16.msra.mxu0 0
        %1786 = vmatprep.subr.bf16.mxu0 0
        %1787 = vmatpush2.bf16.msra.mxu0 0
        %1788 = vmatprep.subr.bf16.mxu0 0
        %1789 = vmatpush2.bf16.msra.mxu0 0
        %1790 = vmatprep.subr.bf16.mxu0 0
        %1791 = vmatpush2.bf16.msra.mxu0 0
        %1792 = vmatprep.subr.bf16.mxu0 0
        %1793 = vmatpush2.bf16.msra.mxu0 0
        %1794 = vmatprep.subr.bf16.mxu0 0
        %1795 = vmatpush2.bf16.msra.mxu0 0
        %1796 = vmatprep.subr.bf16.mxu0 0
        %1797 = vmatpush2.bf16.msra.mxu0 0
        %1798 = vmatprep.mubr.bf16.mxu0 0
        %1799 = vmatmul.mubr.bf16.gmra.mxu0 %v1761
        %v1800 = vpop.f32.mrf.mxu0
        %v1801 = vadd.f32 0.0, %v1800
        %v1802 = vpop.f32.mrf.mxu0
        %v1803 = vpop.f32.mrf.mxu0
        %v1804 = vpop.f32.mrf.mxu0
        %1805 = vdwg.mxu0
        %1806 = vrot.lane.b32.xlu0 %v1464, 64
        %v1807 = vpop.permute.xlu0 %1806
        %v1809 = vsel %vm822, %v1708, 0
        %v1812 = vsel %vm1069, %v1807, 0
        %1814 = vmatprep.subr.bf16.mxu0 0
        %1815 = vmatpush1.bf16.msra.mxu0 0
        %1816 = vmatprep.subr.bf16.mxu0 0
        %1817 = vmatpush1.bf16.msra.mxu0 0
        %1818 = vmatprep.subr.bf16.mxu0 0
        %1819 = vmatpush1.bf16.msra.mxu0 0
        %1820 = vmatprep.subr.bf16.mxu0 0
        %1821 = vmatpush1.bf16.msra.mxu0 0
        %1822 = vmatprep.subr.bf16.mxu0 0
        %1823 = vmatpush1.bf16.msra.mxu0 0
        %1824 = vmatprep.subr.bf16.mxu0 0
        %1825 = vmatpush1.bf16.msra.mxu0 0
        %1826 = vmatprep.subr.bf16.mxu0 0
        %1827 = vmatpush1.bf16.msra.mxu0 0
        %1828 = vmatprep.subr.bf16.mxu0 0
        %1829 = vmatpush1.bf16.msra.mxu0 %v1812
        %1830 = vmatprep.subr.bf16.mxu0 0
        %1831 = vmatpush2.bf16.msra.mxu0 0
        %1832 = vmatprep.subr.bf16.mxu0 0
        %1833 = vmatpush2.bf16.msra.mxu0 0
        %1834 = vmatprep.subr.bf16.mxu0 0
        %1835 = vmatpush2.bf16.msra.mxu0 0
        %1836 = vmatprep.subr.bf16.mxu0 0
        %1837 = vmatpush2.bf16.msra.mxu0 0
        %1838 = vmatprep.subr.bf16.mxu0 0
        %1839 = vmatpush2.bf16.msra.mxu0 0
        %1840 = vmatprep.subr.bf16.mxu0 0
        %1841 = vmatpush2.bf16.msra.mxu0 0
        %1842 = vmatprep.subr.bf16.mxu0 0
        %1843 = vmatpush2.bf16.msra.mxu0 0
        %1844 = vmatprep.subr.bf16.mxu0 0
        %1845 = vmatpush2.bf16.msra.mxu0 0
        %1846 = vmatprep.mubr.bf16.mxu0 0
        %1847 = vmatmul.mubr.bf16.gmra.mxu0 %v1809
        %v1848 = vpop.f32.mrf.mxu0
        %v1849 = vadd.f32 0.0, %v1848
        %v1850 = vpop.f32.mrf.mxu0
        %v1851 = vpop.f32.mrf.mxu0
        %v1852 = vpop.f32.mrf.mxu0
        %1853 = vdwg.mxu0
        %1854 = vrot.lane.b32.xlu0 %v1465, 64
        %v1855 = vpop.permute.xlu0 %1854
        %v1857 = vsel %vm822, %v1709, 0
        %v1860 = vsel %vm1069, %v1855, 0
        %1862 = vmatprep.subr.bf16.mxu0 0
        %1863 = vmatpush1.bf16.msra.mxu0 0
        %1864 = vmatprep.subr.bf16.mxu0 0
        %1865 = vmatpush1.bf16.msra.mxu0 0
        %1866 = vmatprep.subr.bf16.mxu0 0
        %1867 = vmatpush1.bf16.msra.mxu0 0
        %1868 = vmatprep.subr.bf16.mxu0 0
        %1869 = vmatpush1.bf16.msra.mxu0 0
        %1870 = vmatprep.subr.bf16.mxu0 0
        %1871 = vmatpush1.bf16.msra.mxu0 0
        %1872 = vmatprep.subr.bf16.mxu0 0
        %1873 = vmatpush1.bf16.msra.mxu0 0
        %1874 = vmatprep.subr.bf16.mxu0 0
        %1875 = vmatpush1.bf16.msra.mxu0 0
        %1876 = vmatprep.subr.bf16.mxu0 0
        %1877 = vmatpush1.bf16.msra.mxu0 %v1860
        %1878 = vmatprep.subr.bf16.mxu0 0
        %1879 = vmatpush2.bf16.msra.mxu0 0
        %1880 = vmatprep.subr.bf16.mxu0 0
        %1881 = vmatpush2.bf16.msra.mxu0 0
        %1882 = vmatprep.subr.bf16.mxu0 0
        %1883 = vmatpush2.bf16.msra.mxu0 0
        %1884 = vmatprep.subr.bf16.mxu0 0
        %1885 = vmatpush2.bf16.msra.mxu0 0
        %1886 = vmatprep.subr.bf16.mxu0 0
        %1887 = vmatpush2.bf16.msra.mxu0 0
        %1888 = vmatprep.subr.bf16.mxu0 0
        %1889 = vmatpush2.bf16.msra.mxu0 0
        %1890 = vmatprep.subr.bf16.mxu0 0
        %1891 = vmatpush2.bf16.msra.mxu0 0
        %1892 = vmatprep.subr.bf16.mxu0 0
        %1893 = vmatpush2.bf16.msra.mxu0 0
        %1894 = vmatprep.mubr.bf16.mxu0 0
        %1895 = vmatmul.mubr.bf16.gmra.mxu0 %v1857
        %v1896 = vpop.f32.mrf.mxu0
        %v1897 = vadd.f32 0.0, %v1896
        %v1898 = vpop.f32.mrf.mxu0
        %v1899 = vpop.f32.mrf.mxu0
        %v1900 = vpop.f32.mrf.mxu0
        %1901 = vdwg.mxu0
        %v1902 = vpack.c.bf16 %v1753, %v1753
        %v1903 = vpack.c.bf16 %v1801, %v1801
        %v1904 = vpack.c.bf16 %v1849, %v1849
        %v1905 = vpack.c.bf16 %v1897, %v1897
        %v1907 = vsel %vm822, %v1902, 0
        %1909 = vmatprep.subr.bf16.mxu0 0
        %1910 = vmatpush1.bf16.msra.mxu0 0
        %1911 = vmatprep.subr.bf16.mxu0 0
        %1912 = vmatpush1.bf16.msra.mxu0 0
        %1913 = vmatprep.subr.bf16.mxu0 0
        %1914 = vmatpush1.bf16.msra.mxu0 0
        %1915 = vmatprep.subr.bf16.mxu0 0
        %1916 = vmatpush1.bf16.msra.mxu0 0
        %1917 = vmatprep.subr.bf16.mxu0 0
        %1918 = vmatpush1.bf16.msra.mxu0 0
        %1919 = vmatprep.subr.bf16.mxu0 0
        %1920 = vmatpush1.bf16.msra.mxu0 0
        %1921 = vmatprep.subr.bf16.mxu0 0
        %1922 = vmatpush1.bf16.msra.mxu0 0
        %1923 = vmatprep.subr.bf16.mxu0 0
        %1924 = vmatpush1.bf16.msra.mxu0 %v1265
        %1925 = vmatprep.subr.bf16.mxu0 0
        %1926 = vmatpush2.bf16.msra.mxu0 0
        %1927 = vmatprep.subr.bf16.mxu0 0
        %1928 = vmatpush2.bf16.msra.mxu0 0
        %1929 = vmatprep.subr.bf16.mxu0 0
        %1930 = vmatpush2.bf16.msra.mxu0 0
        %1931 = vmatprep.subr.bf16.mxu0 0
        %1932 = vmatpush2.bf16.msra.mxu0 0
        %1933 = vmatprep.subr.bf16.mxu0 0
        %1934 = vmatpush2.bf16.msra.mxu0 0
        %1935 = vmatprep.subr.bf16.mxu0 0
        %1936 = vmatpush2.bf16.msra.mxu0 0
        %1937 = vmatprep.subr.bf16.mxu0 0
        %1938 = vmatpush2.bf16.msra.mxu0 0
        %1939 = vmatprep.subr.bf16.mxu0 0
        %1940 = vmatpush2.bf16.msra.mxu0 0
        %1941 = vmatprep.mubr.bf16.mxu0 0
        %1942 = vmatmul.mubr.bf16.gmra.mxu0 %v1907
        %v1943 = vpop.f32.mrf.mxu0
        %v1944 = vadd.f32 0.0, %v1943
        %v1945 = vpop.f32.mrf.mxu0
        %v1946 = vpop.f32.mrf.mxu0
        %v1947 = vpop.f32.mrf.mxu0
        %1948 = vdwg.mxu0
        %v1950 = vsel %vm822, %v1903, 0
        %1952 = vmatprep.subr.bf16.mxu0 0
        %1953 = vmatpush1.bf16.msra.mxu0 0
        %1954 = vmatprep.subr.bf16.mxu0 0
        %1955 = vmatpush1.bf16.msra.mxu0 0
        %1956 = vmatprep.subr.bf16.mxu0 0
        %1957 = vmatpush1.bf16.msra.mxu0 0
        %1958 = vmatprep.subr.bf16.mxu0 0
        %1959 = vmatpush1.bf16.msra.mxu0 0
        %1960 = vmatprep.subr.bf16.mxu0 0
        %1961 = vmatpush1.bf16.msra.mxu0 0
        %1962 = vmatprep.subr.bf16.mxu0 0
        %1963 = vmatpush1.bf16.msra.mxu0 0
        %1964 = vmatprep.subr.bf16.mxu0 0
        %1965 = vmatpush1.bf16.msra.mxu0 0
        %1966 = vmatprep.subr.bf16.mxu0 0
        %1967 = vmatpush1.bf16.msra.mxu0 %v1311
        %1968 = vmatprep.subr.bf16.mxu0 0
        %1969 = vmatpush2.bf16.msra.mxu0 0
        %1970 = vmatprep.subr.bf16.mxu0 0
        %1971 = vmatpush2.bf16.msra.mxu0 0
        %1972 = vmatprep.subr.bf16.mxu0 0
        %1973 = vmatpush2.bf16.msra.mxu0 0
        %1974 = vmatprep.subr.bf16.mxu0 0
        %1975 = vmatpush2.bf16.msra.mxu0 0
        %1976 = vmatprep.subr.bf16.mxu0 0
        %1977 = vmatpush2.bf16.msra.mxu0 0
        %1978 = vmatprep.subr.bf16.mxu0 0
        %1979 = vmatpush2.bf16.msra.mxu0 0
        %1980 = vmatprep.subr.bf16.mxu0 0
        %1981 = vmatpush2.bf16.msra.mxu0 0
        %1982 = vmatprep.subr.bf16.mxu0 0
        %1983 = vmatpush2.bf16.msra.mxu0 0
        %1984 = vmatprep.mubr.bf16.mxu0 0
        %1985 = vmatmul.mubr.bf16.gmra.mxu0 %v1950
        %v1986 = vpop.f32.mrf.mxu0
        %v1987 = vadd.f32 0.0, %v1986
        %v1988 = vpop.f32.mrf.mxu0
        %v1989 = vpop.f32.mrf.mxu0
        %v1990 = vpop.f32.mrf.mxu0
        %1991 = vdwg.mxu0
        %v1993 = vsel %vm822, %v1904, 0
        %1995 = vmatprep.subr.bf16.mxu0 0
        %1996 = vmatpush1.bf16.msra.mxu0 0
        %1997 = vmatprep.subr.bf16.mxu0 0
        %1998 = vmatpush1.bf16.msra.mxu0 0
        %1999 = vmatprep.subr.bf16.mxu0 0
        %2000 = vmatpush1.bf16.msra.mxu0 0
        %2001 = vmatprep.subr.bf16.mxu0 0
        %2002 = vmatpush1.bf16.msra.mxu0 0
        %2003 = vmatprep.subr.bf16.mxu0 0
        %2004 = vmatpush1.bf16.msra.mxu0 0
        %2005 = vmatprep.subr.bf16.mxu0 0
        %2006 = vmatpush1.bf16.msra.mxu0 0
        %2007 = vmatprep.subr.bf16.mxu0 0
        %2008 = vmatpush1.bf16.msra.mxu0 0
        %2009 = vmatprep.subr.bf16.mxu0 0
        %2010 = vmatpush1.bf16.msra.mxu0 %v1357
        %2011 = vmatprep.subr.bf16.mxu0 0
        %2012 = vmatpush2.bf16.msra.mxu0 0
        %2013 = vmatprep.subr.bf16.mxu0 0
        %2014 = vmatpush2.bf16.msra.mxu0 0
        %2015 = vmatprep.subr.bf16.mxu0 0
        %2016 = vmatpush2.bf16.msra.mxu0 0
        %2017 = vmatprep.subr.bf16.mxu0 0
        %2018 = vmatpush2.bf16.msra.mxu0 0
        %2019 = vmatprep.subr.bf16.mxu0 0
        %2020 = vmatpush2.bf16.msra.mxu0 0
        %2021 = vmatprep.subr.bf16.mxu0 0
        %2022 = vmatpush2.bf16.msra.mxu0 0
        %2023 = vmatprep.subr.bf16.mxu0 0
        %2024 = vmatpush2.bf16.msra.mxu0 0
        %2025 = vmatprep.subr.bf16.mxu0 0
        %2026 = vmatpush2.bf16.msra.mxu0 0
        %2027 = vmatprep.mubr.bf16.mxu0 0
        %2028 = vmatmul.mubr.bf16.gmra.mxu0 %v1993
        %v2029 = vpop.f32.mrf.mxu0
        %v2030 = vadd.f32 0.0, %v2029
        %v2031 = vpop.f32.mrf.mxu0
        %v2032 = vpop.f32.mrf.mxu0
        %v2033 = vpop.f32.mrf.mxu0
        %2034 = vdwg.mxu0
        %v2036 = vsel %vm822, %v1905, 0
        %2038 = vmatprep.subr.bf16.mxu0 0
        %2039 = vmatpush1.bf16.msra.mxu0 0
        %2040 = vmatprep.subr.bf16.mxu0 0
        %2041 = vmatpush1.bf16.msra.mxu0 0
        %2042 = vmatprep.subr.bf16.mxu0 0
        %2043 = vmatpush1.bf16.msra.mxu0 0
        %2044 = vmatprep.subr.bf16.mxu0 0
        %2045 = vmatpush1.bf16.msra.mxu0 0
        %2046 = vmatprep.subr.bf16.mxu0 0
        %2047 = vmatpush1.bf16.msra.mxu0 0
        %2048 = vmatprep.subr.bf16.mxu0 0
        %2049 = vmatpush1.bf16.msra.mxu0 0
        %2050 = vmatprep.subr.bf16.mxu0 0
        %2051 = vmatpush1.bf16.msra.mxu0 0
        %2052 = vmatprep.subr.bf16.mxu0 0
        %2053 = vmatpush1.bf16.msra.mxu0 %v1403
        %2054 = vmatprep.subr.bf16.mxu0 0
        %2055 = vmatpush2.bf16.msra.mxu0 0
        %2056 = vmatprep.subr.bf16.mxu0 0
        %2057 = vmatpush2.bf16.msra.mxu0 0
        %2058 = vmatprep.subr.bf16.mxu0 0
        %2059 = vmatpush2.bf16.msra.mxu0 0
        %2060 = vmatprep.subr.bf16.mxu0 0
        %2061 = vmatpush2.bf16.msra.mxu0 0
        %2062 = vmatprep.subr.bf16.mxu0 0
        %2063 = vmatpush2.bf16.msra.mxu0 0
        %2064 = vmatprep.subr.bf16.mxu0 0
        %2065 = vmatpush2.bf16.msra.mxu0 0
        %2066 = vmatprep.subr.bf16.mxu0 0
        %2067 = vmatpush2.bf16.msra.mxu0 0
        %2068 = vmatprep.subr.bf16.mxu0 0
        %2069 = vmatpush2.bf16.msra.mxu0 0
        %2070 = vmatprep.mubr.bf16.mxu0 0
        %2071 = vmatmul.mubr.bf16.gmra.mxu0 %v2036
        %v2072 = vpop.f32.mrf.mxu0
        %v2073 = vadd.f32 0.0, %v2072
        %v2074 = vpop.f32.mrf.mxu0
        %v2075 = vpop.f32.mrf.mxu0
        %v2076 = vpop.f32.mrf.mxu0
        %2077 = vdwg.mxu0
        %v2078 = vsel %vm683, %v1944, 0.0
        %v2079 = vsel %vm683, %v1987, 0.0
        %v2080 = vadd.f32 %v2078, %v2079
        %v2081 = vsel %vm683, %v2030, 0.0
        %v2082 = vadd.f32 %v2080, %v2081
        %v2083 = vsel %vm683, %v2073, 0.0
        %v2084 = vadd.f32 %v2082, %v2083
        %v2085 = vadd.f32 %v679, %v1451
        %v2086 = vadd.f32 %v680, %v2084
        %v2087 = vld [vmem:[%s642] sm:$0x1]
        %v2089 = vlaneseq
        %v2090 = vshrl.u32 %v2089, 7
        %v2091 = vsub.s32 0, %v2090
        %v2092 = vrot.slane %v2087, %v2091
        %v2094 = vadd.f32 %v2085, %v2092
        %v2095 = vadd.f32 %v2086, %v2092
        %v2096 = vld [vmem:[%s645] sm:$0x1]
        %v2097 = vld [vmem:[%s648] sm:$0x1]
        %v2098 = vsel %vm683, %v2094, 0.0
        %2099 = vadd.xlane.f32.xlu0 %v2098
        %v2100 = vpop.xlane.xlu0 %2099
        %v2101 = vsel %vm683, %v2095, 0.0
        %2102 = vadd.xlane.f32.xlu0 %v2101
        %v2103 = vpop.xlane.xlu0 %2102
        %v2104 = vmul.f32 %v2100, %v690
        %v2105 = vmul.f32 %v2103, %v690
        %v2106 = vsub.f32 %v2094, %v2104
        %v2107 = vsub.f32 %v2095, %v2105
        %v2108 = vmul.f32 %v2106, %v2106
        %v2109 = vmul.f32 %v2107, %v2107
        %v2110 = vsel %vm683, %v2108, 0.0
        %2111 = vadd.xlane.f32.xlu0 %v2110
        %v2112 = vpop.xlane.xlu0 %2111
        %v2113 = vsel %vm683, %v2109, 0.0
        %2114 = vadd.xlane.f32.xlu0 %v2113
        %v2115 = vpop.xlane.xlu0 %2114
        %v2116 = vmul.f32 %v2112, %v690
        %v2117 = vmul.f32 %v2115, %v690
        %v2118 = vadd.f32 %v2116, 1e-05
        %v2119 = vadd.f32 %v2117, 1e-05
        %v2120 = vrsqrt.pop %v2118
        %v2121 = vrsqrt.pop %v2119
        %v2122 = vmul.f32 %v2106, %v2120
        %v2123 = vmul.f32 %v2107, %v2121
        %v2125 = vlaneseq
        %v2126 = vshrl.u32 %v2125, 7
        %v2127 = vsub.s32 0, %v2126
        %v2128 = vrot.slane %v2096, %v2127
        %v2130 = vmul.f32 %v2122, %v2128
        %v2131 = vmul.f32 %v2123, %v2128
        %v2133 = vlaneseq
        %v2134 = vshrl.u32 %v2133, 7
        %v2135 = vsub.s32 0, %v2134
        %v2136 = vrot.slane %v2097, %v2135
        %v2138 = vadd.f32 %v2130, %v2136
        %v2139 = vadd.f32 %v2131, %v2136
        %v2140 = vpack.c.bf16 %v2139, %v2138
        %v2141 = vld [vmem:[%s653] sm:$0xf]
        %v2142 = vld [vmem:[%s653 + $0x4] sm:$0xf]
        %v2143 = vld [vmem:[%s653 + $0x8] sm:$0xf]
        %v2144 = vld [vmem:[%s653 + $0xc] sm:$0xf]
        %v2145 = vld [vmem:[%s656] sm:$0x1]
        %v2147 = vlaneseq
        %v2148 = vshrl.u32 %v2147, 7
        %v2149 = vsub.s32 0, %v2148
        %v2150 = vrot.slane %v2145, %v2149
        %v2156 = vunpack.c.l.b16 %v2141
        %v2157 = vunpack.c.l.b16 %v2142
        %v2158 = vunpack.c.l.b16 %v2143
        %v2159 = vunpack.c.l.b16 %v2144
        %v2160 = vpack.c.b16 %v2157, %v2156
        %v2161 = vpack.c.b16 %v2159, %v2158
        %v2165 = vsel %vm683, %v2140, 0
        %2167 = vmatprep.subr.bf16.mxu0 0
        %2168 = vmatpush1.bf16.msra.mxu0 0
        %2169 = vmatprep.subr.bf16.mxu0 0
        %2170 = vmatpush1.bf16.msra.mxu0 0
        %2171 = vmatprep.subr.bf16.mxu0 0
        %2172 = vmatpush1.bf16.msra.mxu0 0
        %2173 = vmatprep.subr.bf16.mxu0 0
        %2174 = vmatpush1.bf16.msra.mxu0 0
        %2175 = vmatprep.subr.bf16.mxu0 0
        %2176 = vmatpush1.bf16.msra.mxu0 0
        %2177 = vmatprep.subr.bf16.mxu0 0
        %2178 = vmatpush1.bf16.msra.mxu0 0
        %2179 = vmatprep.subr.bf16.mxu0 0
        %2180 = vmatpush1.bf16.msra.mxu0 %v2161
        %2181 = vmatprep.subr.bf16.mxu0 0
        %2182 = vmatpush1.bf16.msra.mxu0 %v2160
        %2183 = vmatprep.subr.bf16.mxu0 0
        %2184 = vmatpush2.bf16.msra.mxu0 0
        %2185 = vmatprep.subr.bf16.mxu0 0
        %2186 = vmatpush2.bf16.msra.mxu0 0
        %2187 = vmatprep.subr.bf16.mxu0 0
        %2188 = vmatpush2.bf16.msra.mxu0 0
        %2189 = vmatprep.subr.bf16.mxu0 0
        %2190 = vmatpush2.bf16.msra.mxu0 0
        %2191 = vmatprep.subr.bf16.mxu0 0
        %2192 = vmatpush2.bf16.msra.mxu0 0
        %2193 = vmatprep.subr.bf16.mxu0 0
        %2194 = vmatpush2.bf16.msra.mxu0 0
        %2195 = vmatprep.subr.bf16.mxu0 0
        %2196 = vmatpush2.bf16.msra.mxu0 0
        %2197 = vmatprep.subr.bf16.mxu0 0
        %2198 = vmatpush2.bf16.msra.mxu0 0
        %2199 = vmatprep.mubr.bf16.mxu0 0
        %2200 = vmatmul.mubr.bf16.gmra.mxu0 %v2165
        %v2201 = vpop.f32.mrf.mxu0
        %v2202 = vadd.f32 %v2150, %v2201
        %v2203 = vpop.f32.mrf.mxu0
        %v2204 = vpop.f32.mrf.mxu0
        %v2205 = vadd.f32 %v2150, %v2204
        %v2206 = vpop.f32.mrf.mxu0
        %2207 = vdwg.mxu0
        %v2208 = vmul.f32 %v2202, 1.702
        %v2209 = vmul.f32 %v2205, 1.702
        %v2210 = vxor.u32 %v2208, 2147483648
        %v2211 = vxor.u32 %v2209, 2147483648
        %v2212 = vmul.f32 %v2210, 1.442695
        %v2213 = vpow.pop %v2212
        %v2214 = vmul.f32 %v2211, 1.442695
        %v2215 = vpow.pop %v2214
        %v2216 = vadd.f32 %v2213, 1.0
        %v2217 = vadd.f32 %v2215, 1.0
        %v2218 = vrcp.pop %v2216
        %v2219 = vmul.f32 1.0, %v2218
        %v2220 = vrcp.pop %v2217
        %v2221 = vmul.f32 1.0, %v2220
        %v2222 = vmul.f32 %v2202, %v2219
        %v2223 = vmul.f32 %v2205, %v2221
        %v2224 = vpack.c.bf16 %v2223, %v2222
        %v2225 = vld [vmem:[%s661] sm:$0xf]
        %v2226 = vld [vmem:[%s661 + $0x4] sm:$0xf]
        %v2227 = vld [vmem:[%s661 + $0x8] sm:$0xf]
        %v2228 = vld [vmem:[%s661 + $0xc] sm:$0xf]
        %v2229 = vld [vmem:[%s661 + $0x10] sm:$0xf]
        %v2230 = vld [vmem:[%s661 + $0x14] sm:$0xf]
        %v2231 = vld [vmem:[%s661 + $0x18] sm:$0xf]
        %v2232 = vld [vmem:[%s661 + $0x1c] sm:$0xf]
        %v2233 = vld [vmem:[%s661 + $0x20] sm:$0xf]
        %v2234 = vld [vmem:[%s661 + $0x24] sm:$0xf]
        %v2235 = vld [vmem:[%s661 + $0x28] sm:$0xf]
        %v2236 = vld [vmem:[%s661 + $0x2c] sm:$0xf]
        %v2237 = vld [vmem:[%s661 + $0x30] sm:$0xf]
        %v2238 = vld [vmem:[%s661 + $0x34] sm:$0xf]
        %v2239 = vld [vmem:[%s661 + $0x38] sm:$0xf]
        %v2240 = vld [vmem:[%s661 + $0x3c] sm:$0xf]
        %v2241 = vld [vmem:[%s664] sm:$0x1]
        %v2243 = vlaneseq
        %v2244 = vshrl.u32 %v2243, 7
        %v2245 = vsub.s32 0, %v2244
        %v2246 = vrot.slane %v2241, %v2245
        %v2264 = vunpack.c.l.b16 %v2225
        %v2265 = vunpack.c.l.b16 %v2226
        %v2266 = vunpack.c.l.b16 %v2227
        %v2267 = vunpack.c.l.b16 %v2228
        %v2268 = vunpack.c.l.b16 %v2229
        %v2269 = vunpack.c.l.b16 %v2230
        %v2270 = vunpack.c.l.b16 %v2231
        %v2271 = vunpack.c.l.b16 %v2232
        %v2272 = vunpack.c.l.b16 %v2233
        %v2273 = vunpack.c.l.b16 %v2234
        %v2274 = vunpack.c.l.b16 %v2235
        %v2275 = vunpack.c.l.b16 %v2236
        %v2276 = vunpack.c.l.b16 %v2237
        %v2277 = vunpack.c.l.b16 %v2238
        %v2278 = vunpack.c.l.b16 %v2239
        %v2279 = vunpack.c.l.b16 %v2240
        %v2280 = vpack.c.b16 %v2265, %v2264
        %v2281 = vpack.c.b16 %v2267, %v2266
        %v2282 = vpack.c.b16 %v2269, %v2268
        %v2283 = vpack.c.b16 %v2271, %v2270
        %v2284 = vpack.c.b16 %v2273, %v2272
        %v2285 = vpack.c.b16 %v2275, %v2274
        %v2286 = vpack.c.b16 %v2277, %v2276
        %v2287 = vpack.c.b16 %v2279, %v2278
        %2296 = vmatprep.subr.bf16.mxu0 0
        %2297 = vmatpush1.bf16.msra.mxu0 %v2287
        %2298 = vmatprep.subr.bf16.mxu0 0
        %2299 = vmatpush1.bf16.msra.mxu0 %v2286
        %2300 = vmatprep.subr.bf16.mxu0 0
        %2301 = vmatpush1.bf16.msra.mxu0 %v2285
        %2302 = vmatprep.subr.bf16.mxu0 0
        %2303 = vmatpush1.bf16.msra.mxu0 %v2284
        %2304 = vmatprep.subr.bf16.mxu0 0
        %2305 = vmatpush1.bf16.msra.mxu0 %v2283
        %2306 = vmatprep.subr.bf16.mxu0 0
        %2307 = vmatpush1.bf16.msra.mxu0 %v2282
        %2308 = vmatprep.subr.bf16.mxu0 0
        %2309 = vmatpush1.bf16.msra.mxu0 %v2281
        %2310 = vmatprep.subr.bf16.mxu0 0
        %2311 = vmatpush1.bf16.msra.mxu0 %v2280
        %2312 = vmatprep.subr.bf16.mxu0 0
        %2313 = vmatpush2.bf16.msra.mxu0 0
        %2314 = vmatprep.subr.bf16.mxu0 0
        %2315 = vmatpush2.bf16.msra.mxu0 0
        %2316 = vmatprep.subr.bf16.mxu0 0
        %2317 = vmatpush2.bf16.msra.mxu0 0
        %2318 = vmatprep.subr.bf16.mxu0 0
        %2319 = vmatpush2.bf16.msra.mxu0 0
        %2320 = vmatprep.subr.bf16.mxu0 0
        %2321 = vmatpush2.bf16.msra.mxu0 0
        %2322 = vmatprep.subr.bf16.mxu0 0
        %2323 = vmatpush2.bf16.msra.mxu0 0
        %2324 = vmatprep.subr.bf16.mxu0 0
        %2325 = vmatpush2.bf16.msra.mxu0 0
        %2326 = vmatprep.subr.bf16.mxu0 0
        %2327 = vmatpush2.bf16.msra.mxu0 0
        %2328 = vmatprep.mubr.bf16.mxu0 0
        %2329 = vmatmul.mubr.bf16.gmra.mxu0 %v2224
        %v2330 = vpop.f32.mrf.mxu0
        %v2331 = vadd.f32 %v2246, %v2330
        %v2332 = vpop.f32.mrf.mxu0
        %v2333 = vpop.f32.mrf.mxu0
        %v2334 = vadd.f32 %v2246, %v2333
        %v2335 = vpop.f32.mrf.mxu0
        %2336 = vdwg.mxu0
        %v2337 = vadd.f32 %v2094, %v2331
        %v2338 = vadd.f32 %v2095, %v2334
        %2339 = vst.msk [vmem:[#allocation2] sm:$0xff] %vm683, %v2337
        %2340 = vst.msk [vmem:[#allocation2 + $0x8] sm:$0xff] %vm683, %v2338
        // Predicated region
        $region81: #{tpu_custom_call.1} parent=75 // pred_check
          %p2341 = pneg %p415
        $region82: #{tpu_custom_call.1} parent=75 // pred_check_branch
          %2343 = sbr.rel (%p2341) target = $region84
        $region83: #{tpu_custom_call.1} parent=75 // pred_region
          %s2344 = smul.u32 2, %s30
          %s2346 = ssub.s32 256, 256
          %2347 = vsyncadd [#allocation3], %s2346
          %s2348 = smul.addr %s2344, 128
          %s2349 = scalar_lea.hbm %s14, %s2348
          %s2350 = sshll.u32 [#allocation2], 4
          %s2351 = int_to_ptr.vmem [resolvable:$true] %s2350
          %2356 = dma.vmem_to_hbm [thread:$0]  %s2351, 256, %s2349, [#allocation3], 128, 128, 8
        $region84: #{tpu_custom_call.1} parent=75 // pred_fallthru
          _
        // Predicated region
        $region85: #{tpu_custom_call.1} parent=75 // pred_check
          %p2357 = pneg %p415
        $region86: #{tpu_custom_call.1} parent=75 // pred_check_branch
          %2359 = sbr.rel (%p2357) target = $region88
        $region87: #{tpu_custom_call.1} parent=75 // pred_region
          %2360 = dma.done [#allocation3], 256
        $region88: #{tpu_custom_call.1} parent=75 // pred_fallthru
          _
      $region76: #{tpu_custom_call.1} parent=5 // pred_fallthru
        _
      %p2361 = scmp.le.s32.totalorder 2, %s21
      // Predicated region
      $region89: #{tpu_custom_call.1} parent=5 // pred_check
        %p2362 = pneg %p2361
      $region90: #{tpu_custom_call.1} parent=5 // pred_check_branch
        %2364 = sbr.rel (%p2362) target = $region92
      $region91: #{tpu_custom_call.1} parent=5 // pred_region
        %s2365 = ssub.s32 %s21, 2
      $region92: #{tpu_custom_call.1} parent=5 // pred_fallthru
        _
    $region6: #{tpu_custom_call.1} parent=1 // loop_footer
      %s25 = sadd.s32 1, %s21
    $region7: #{tpu_custom_call.1} parent=1 // loop_footer_branch
      %20 = sbr.rel target = $region3
    $region8: #{tpu_custom_call.1} parent=1 // loop_exit
      _
    %2366 = vsyncpa [#allocation3], 1
    %s2367 = scalar_lea.sflag [#allocation3], 1
    %2368 = vsyncpa %s2367, 1

</llo_original>
